<compile_context>
chip_gen: v6e
topology: v6e:2x2x1
jax: 0.10.0
libtpu: 0.0.40
codegen_flags: <defaults>
</compile_context>

<pallas_src>
import functools

import jax
import jax.numpy as jnp
from jax.experimental import pallas as pl
from jax.experimental.pallas import tpu as pltpu

_MiB = 1024 * 1024


def _round_up(x, m):
    return ((x + m - 1) // m) * m


def _cdiv(a, b):
    return (a + b - 1) // b


def _biaffine_kernel(x_ref, yt_ref, a_ref, u_ref, cb_ref, o_ref, *, n_out, unroll):
    # x_ref : (1, TLx, n_in)        current (batch, Lx-tile)
    # yt_ref: (1, n_in, TLy)        y pre-transposed (lane-dense RHS)
    # a_ref : (n_out, n_in, n_in)   W core        (resident, single-buffered)
    # u_ref : (n_out, 1, n_in)      x-bias row    (resident, single-buffered)
    # cb_ref: (1, n_out, TLx, 1)    precomputed y-bias column  x @ v_o + c_o
    # o_ref : (1, n_out, TLx, TLy)  output ("boxy": Ly is the lane dim)
    x = x_ref[0]                                    # [TLx, n_in]
    yt = yt_ref[0]                                  # [n_in, TLy]

    def one_channel(o):
        # First contraction, K = n_in; x-bias row folded as a broadcast add.
        t = jnp.dot(x, a_ref[o], preferred_element_type=jnp.float32) + u_ref[o]
        # Second contraction, K = n_in, lane-dense RHS (no in-kernel transpose).
        s = jnp.dot(t.astype(x.dtype), yt, preferred_element_type=jnp.float32)
        # y-bias column (constant along Ly), precomputed in the wrapper.
        s = s + cb_ref[0, o]
        o_ref[0, o] = s.astype(o_ref.dtype)

    if unroll:
        for o in range(n_out):                      # small n_out: static unroll
            one_channel(o)
    else:
        def body(o, carry):                         # bounds live ranges
            one_channel(o)
            return carry
        jax.lax.fori_loop(0, n_out, body, 0)


def _vmem_budget_bytes():
    """Physical VMEM of this chip minus headroom for compiler scratch."""
    try:
        cap = int(pltpu.get_tpu_info().vmem_capacity_bytes)
    except Exception:
        cap = 128 * _MiB
    cap = min(cap, 128 * _MiB)
    return max(32 * _MiB, cap - 16 * _MiB)


def _plan_tiles(B, Lx, Ly, n_in, n_out, in_bytes, out_bytes, budget):
    """Pick (tile_lx, tile_ly) so all pipelined blocks fit the VMEM budget."""
    lx_full = _round_up(Lx, 8)
    ly_full = Ly if Ly <= 128 else _round_up(Ly, 128)

    resident = n_out * n_in * (n_in + 1) * in_bytes        # A + u, 1 buffer each

    def est(tlx, tly):
        return (resident
                + 2 * tlx * n_in * in_bytes                # x tile (2 buffers)
                + 2 * n_in * tly * in_bytes                # y^T tile
                + 2 * n_out * tlx * 4                      # colbias tile (f32)
                + 2 * n_out * tlx * tly * out_bytes)       # output tile

    lx_opts = [lx_full] + [t for t in (1024, 512, 256, 128) if t < lx_full]
    ly_opts = [ly_full] + [t for t in (1024, 512, 256, 128) if t < ly_full]
    combos = sorted(((tx, ty) for tx in lx_opts for ty in ly_opts),
                    key=lambda p: (p[0] * p[1], p[1]), reverse=True)

    tile_lx, tile_ly = combos[-1]                   # smallest tiles as fallback
    for tx, ty in combos:
        if est(tx, ty) <= budget:
            tile_lx, tile_ly = tx, ty
            break
    # TODO(synk): if even the smallest tiles exceed the budget (huge
    # n_out*n_in^2 resident weight on v7x), the weight itself needs tiling/fp8.

    # Keep >= 4 parallel grid steps when cheap (v7x has 2 TensorCores).
    while (B * _cdiv(Lx, tile_lx) * _cdiv(Ly, tile_ly) < 4
           and tile_lx >= 256 and tile_lx % 256 == 0):
        tile_lx //= 2
    return tile_lx, tile_ly


def biaffine_forward(x, y, weight, bias_x=True, bias_y=True, *,
                     permute_output=True, compute_dtype=None, out_dtype=None,
                     interpret=False):
    """Pallas implementation of w2ner Biaffine.forward.

    x: [B, Lx, n_in], y: [B, Ly, n_in], weight: [n_out, n_in+bias_x, n_in+bias_y]
    Returns [B, Lx, Ly, n_out] (permute_output=True, matches PyTorch) or
    [B, n_out, Lx, Ly] (permute_output=False; skips one full-tensor HBM pass).
    """
    B, Lx, n_in = x.shape
    By, Ly, n_in_y = y.shape
    assert By == B and n_in_y == n_in
    n_out = weight.shape[0]
    assert weight.shape == (n_out, n_in + int(bias_x), n_in + int(bias_y))

    wdt = weight.dtype
    # Split W so both MXU contractions stay at K = n_in (no padded bias column).
    A = weight[:, :n_in, :n_in]                                    # [n_out, n_in, n_in]
    if bias_x:
        u = weight[:, n_in:n_in + 1, :n_in]                        # [n_out, 1, n_in]
    else:
        u = jnp.zeros((n_out, 1, n_in), wdt)

    # y-bias column (x @ v_o + c_o): MXU-hostile (N = n_out << 128), so it is
    # precomputed here by XLA and passed to the kernel as a tiny broadcast term.
    if bias_y:
        V = weight[:, :n_in, n_in]                                 # [n_out, n_in]
        colbias = jnp.einsum('bxi,oi->box', x.astype(jnp.float32),
                             V.astype(jnp.float32))                # [B, n_out, Lx]
        if bias_x:
            colbias = colbias + weight[:, n_in, n_in].astype(jnp.float32)[None, :, None]
    else:
        colbias = jnp.zeros((B, n_out, Lx), jnp.float32)
    colbias = colbias[..., None]                                   # [B, n_out, Lx, 1]

    # Pre-transpose y once so the kernel's second matmul has a lane-dense RHS.
    yt = jnp.transpose(y, (0, 2, 1))                               # [B, n_in, Ly]

    if compute_dtype is not None:
        x_in = x.astype(compute_dtype)
        yt = yt.astype(compute_dtype)
        A = A.astype(compute_dtype)
        u = u.astype(compute_dtype)
    else:
        x_in = x
    out_dtype = x.dtype if out_dtype is None else out_dtype

    in_bytes = jnp.dtype(x_in.dtype).itemsize
    out_bytes = jnp.dtype(out_dtype).itemsize
    budget = _vmem_budget_bytes()
    tile_lx, tile_ly = _plan_tiles(B, Lx, Ly, n_in, n_out, in_bytes, out_bytes, budget)

    lx_pad = _round_up(Lx, tile_lx)
    ly_pad = _round_up(Ly, tile_ly)
    if lx_pad != Lx:
        x_in = jnp.pad(x_in, ((0, 0), (0, lx_pad - Lx), (0, 0)))
        colbias = jnp.pad(colbias, ((0, 0), (0, 0), (0, lx_pad - Lx), (0, 0)))
    if ly_pad != Ly:
        yt = jnp.pad(yt, ((0, 0), (0, 0), (0, ly_pad - Ly)))
    n_tx = lx_pad // tile_lx
    n_ty = ly_pad // tile_ly

    kernel = functools.partial(_biaffine_kernel, n_out=n_out, unroll=n_out <= 4)

    def call(single_buffer_weights):
        resident = dict(pipeline_mode=pl.Buffered(1)) if single_buffer_weights else {}
        grid_spec = pltpu.PrefetchScalarGridSpec(
            num_scalar_prefetch=0,
            grid=(B, n_tx, n_ty),
            in_specs=[
                pl.BlockSpec((1, tile_lx, n_in), lambda b, i, j: (b, i, 0)),
                pl.BlockSpec((1, n_in, tile_ly), lambda b, i, j: (b, 0, j)),
                # Constant index_map -> fetched once, stays resident; single
                # buffer (no need for a second pipeline buffer that never fills).
                pl.BlockSpec((n_out, n_in, n_in), lambda b, i, j: (0, 0, 0),
                             **resident),
                pl.BlockSpec((n_out, 1, n_in), lambda b, i, j: (0, 0, 0),
                             **resident),
                pl.BlockSpec((1, n_out, tile_lx, 1), lambda b, i, j: (b, 0, i, 0)),
            ],
            out_specs=pl.BlockSpec((1, n_out, tile_lx, tile_ly),
                                   lambda b, i, j: (b, 0, i, j)),
        )
        return pl.pallas_call(
            kernel,
            out_shape=jax.ShapeDtypeStruct((B, n_out, lx_pad, ly_pad), out_dtype),
            grid_spec=grid_spec,
            compiler_params=pltpu.CompilerParams(
                dimension_semantics=("parallel", "parallel", "parallel"),
                vmem_limit_bytes=budget,
            ),
            interpret=interpret,
        )(x_in, yt, A, u, colbias)

    try:
        out_boxy = call(True)
    except Exception:
        # Fallback for jax builds that reject Buffered(1) on pipelined inputs.
        out_boxy = call(False)

    out_boxy = out_boxy[:, :, :Lx, :Ly]
    if permute_output:
        # Matches torch .permute(0, 2, 3, 1). Consumers that accept the boxy
        # layout should pass permute_output=False: this permute is an extra
        # full HBM read+write of the largest tensor with n_out (<128) lanes.
        return jnp.transpose(out_boxy, (0, 2, 3, 1))
    return out_boxy


def init_biaffine_weight(key, n_in, n_out=1, bias_x=True, bias_y=True,
                         dtype=jnp.float32):
    # Xavier-normal with the same fan computation as PyTorch for a 3-D tensor.
    dx = n_in + int(bias_x)
    dy = n_in + int(bias_y)
    fan_in = dx * dy
    fan_out = n_out * dy
    std = (2.0 / (fan_in + fan_out)) ** 0.5
    return std * jax.random.normal(key, (n_out, dx, dy), dtype=dtype)


def _reference(x, y, weight, bias_x=True, bias_y=True):
    if bias_x:
        x = jnp.concatenate([x, jnp.ones_like(x[..., :1])], axis=-1)
    if bias_y:
        y = jnp.concatenate([y, jnp.ones_like(y[..., :1])], axis=-1)
    s = jnp.einsum('bxi,oij,byj->boxy', x, weight, y)
    return jnp.transpose(s, (0, 2, 3, 1))


if __name__ == "__main__":
    key = jax.random.PRNGKey(0)
    k_x, k_y, k_w1, k_w2, k_w3, k_x2, k_y2 = jax.random.split(key, 7)

    B, L, n_in = 2, 8, 32
    x = jax.random.normal(k_x, (B, L, n_in), dtype=jnp.float32)
    y = jax.random.normal(k_y, (B, L, n_in), dtype=jnp.float32)

    # Case 1: bias_x=True, bias_y=True (usual w2ner config), n_out=4 (unrolled).
    w1 = init_biaffine_weight(k_w1, n_in, 4, True, True)
    out1 = jax.block_until_ready(biaffine_forward(x, y, w1, True, True))
    ref1 = _reference(x, y, w1, True, True)
    assert out1.shape == (B, L, L, 4), out1.shape
    assert jnp.allclose(out1, ref1, atol=1e-4, rtol=1e-4), "mismatch (bias_x, bias_y)"

    # Case 2: bias_x=False, bias_y=True (zero x-bias path).
    w2 = init_biaffine_weight(k_w2, n_in, 4, False, True)
    out2 = jax.block_until_ready(biaffine_forward(x, y, w2, False, True))
    ref2 = _reference(x, y, w2, False, True)
    assert out2.shape == (B, L, L, 4), out2.shape
    assert jnp.allclose(out2, ref2, atol=1e-4, rtol=1e-4), "mismatch (no bias_x)"

    # Case 3: bias_x=True, bias_y=False, n_out=8 (fori_loop path), ragged Lx/Ly
    # (exercises wrapper padding + output slicing).
    Lx3, Ly3, n_out3 = 12, 20, 8
    x3 = jax.random.normal(k_x2, (B, Lx3, n_in), dtype=jnp.float32)
    y3 = jax.random.normal(k_y2, (B, Ly3, n_in), dtype=jnp.float32)
    w3 = init_biaffine_weight(k_w3, n_in, n_out3, True, False)
    out3 = jax.block_until_ready(biaffine_forward(x3, y3, w3, True, False))
    ref3 = _reference(x3, y3, w3, True, False)
    assert out3.shape == (B, Lx3, Ly3, n_out3), out3.shape
    assert jnp.allclose(out3, ref3, atol=1e-4, rtol=1e-4), "mismatch (no bias_y)"

    # Case 4: bf16 compute (f32 MXU accumulation), boxy output layout.
    out4 = jax.block_until_ready(
        biaffine_forward(x, y, w1, True, True, permute_output=False,
                         compute_dtype=jnp.bfloat16))
    ref4 = jnp.transpose(ref1, (0, 3, 1, 2))
    assert out4.shape == (B, 4, L, L), out4.shape
    assert jnp.allclose(out4.astype(jnp.float32), ref4, atol=5e-2, rtol=5e-2), \
        "mismatch (bf16 compute)"

    print("KERNEL_OK")
</pallas_src>

<mosaic_0001>
module attributes {stable_mosaic.version = 11 : i64} {
  func.func @_biaffine_kernel(%arg0: i32, %arg1: i32, %arg2: i32, %arg3: memref<1x8x32xf32, #tpu.memory_space<vmem>>, %arg4: memref<1x32x8xf32, #tpu.memory_space<vmem>>, %arg5: memref<4x32x32xf32, #tpu.memory_space<vmem>>, %arg6: memref<4x1x32xf32, #tpu.memory_space<vmem>>, %arg7: memref<1x4x8x1xf32, #tpu.memory_space<vmem>>, %arg8: memref<1x4x8x8xf32, #tpu.memory_space<vmem>>) attributes {dimension_semantics = [#tpu.dimension_semantics<parallel>, #tpu.dimension_semantics<parallel>, #tpu.dimension_semantics<parallel>], iteration_bounds = array<i64: 2, 1, 1>, scalar_prefetch = 0 : i64, scratch_operands = 0 : i64, tpu.core_type = #tpu.core_type<tc>, window_params = [{transform_indices = @transform_0, window_bounds = array<i64: 1, 8, 32>}, {transform_indices = @transform_1, window_bounds = array<i64: 1, 32, 8>}, {pipeline_mode = #tpu.pipeline_mode<synchronous>, transform_indices = @transform_2, window_bounds = array<i64: 4, 32, 32>}, {pipeline_mode = #tpu.pipeline_mode<synchronous>, transform_indices = @transform_3, window_bounds = array<i64: 4, 1, 32>}, {transform_indices = @transform_4, window_bounds = array<i64: 1, 4, 8, 1>}, {transform_indices = @transform_5, window_bounds = array<i64: 1, 4, 8, 8>}]} {
    %c0 = arith.constant 0 : index
    %c0_0 = arith.constant 0 : index
    %c0_1 = arith.constant 0 : index
    %0 = vector.load %arg3[%c0, %c0_0, %c0_1] : memref<1x8x32xf32, #tpu.memory_space<vmem>>, vector<1x8x32xf32>
    %1 = vector.shape_cast %0 : vector<1x8x32xf32> to vector<8x32xf32>
    %c0_2 = arith.constant 0 : index
    %c0_3 = arith.constant 0 : index
    %c0_4 = arith.constant 0 : index
    %2 = vector.load %arg4[%c0_2, %c0_3, %c0_4] : memref<1x32x8xf32, #tpu.memory_space<vmem>>, vector<1x32x8xf32>
    %3 = vector.shape_cast %2 : vector<1x32x8xf32> to vector<32x8xf32>
    %c0_5 = arith.constant 0 : index
    %c0_6 = arith.constant 0 : index
    %c0_7 = arith.constant 0 : index
    %4 = vector.load %arg5[%c0_5, %c0_6, %c0_7] : memref<4x32x32xf32, #tpu.memory_space<vmem>>, vector<1x32x32xf32>
    %5 = vector.shape_cast %4 : vector<1x32x32xf32> to vector<32x32xf32>
    %cst = arith.constant dense<0.000000e+00> : vector<8x32xf32>
    %6 = tpu.matmul %1, %5, %cst {dimension_numbers = #tpu.dot_dimension_numbers<[1], [0], [0], [1], [0, 0, 1, 1], [], []>} : vector<8x32xf32>, vector<32x32xf32>, vector<8x32xf32> -> vector<8x32xf32>
    %c0_8 = arith.constant 0 : index
    %c0_9 = arith.constant 0 : index
    %c0_10 = arith.constant 0 : index
    %7 = vector.load %arg6[%c0_8, %c0_9, %c0_10] : memref<4x1x32xf32, #tpu.memory_space<vmem>>, vector<1x1x32xf32>
    %8 = vector.shape_cast %7 : vector<1x1x32xf32> to vector<1x32xf32>
    %9 = vector.broadcast %8 : vector<1x32xf32> to vector<8x32xf32>
    %10 = arith.addf %6, %9 : vector<8x32xf32>
    %cst_11 = arith.constant dense<0.000000e+00> : vector<8x8xf32>
    %11 = tpu.matmul %10, %3, %cst_11 {dimension_numbers = #tpu.dot_dimension_numbers<[1], [0], [0], [1], [0, 0, 1, 1], [], []>} : vector<8x32xf32>, vector<32x8xf32>, vector<8x8xf32> -> vector<8x8xf32>
    %c0_12 = arith.constant 0 : index
    %c0_13 = arith.constant 0 : index
    %c0_14 = arith.constant 0 : index
    %c0_15 = arith.constant 0 : index
    %12 = vector.load %arg7[%c0_12, %c0_13, %c0_14, %c0_15] : memref<1x4x8x1xf32, #tpu.memory_space<vmem>>, vector<1x1x8x1xf32>
    %13 = vector.shape_cast %12 : vector<1x1x8x1xf32> to vector<8x1xf32>
    %14 = vector.broadcast %13 : vector<8x1xf32> to vector<8x8xf32>
    %15 = arith.addf %11, %14 : vector<8x8xf32>
    %c0_16 = arith.constant 0 : index
    %c0_17 = arith.constant 0 : index
    %c0_18 = arith.constant 0 : index
    %c0_19 = arith.constant 0 : index
    %16 = vector.load %arg8[%c0_16, %c0_17, %c0_18, %c0_19] : memref<1x4x8x8xf32, #tpu.memory_space<vmem>>, vector<1x1x8x8xf32>
    %17 = vector.shape_cast %16 : vector<1x1x8x8xf32> to vector<8x8xf32>
    %18 = vector.shape_cast %15 : vector<8x8xf32> to vector<1x1x8x8xf32>
    tpu.vector_store %arg8[%c0_16, %c0_17, %c0_18, %c0_19], %18 {strides = array<i32>} : memref<1x4x8x8xf32, #tpu.memory_space<vmem>>, vector<1x1x8x8xf32>,
    %c1 = arith.constant 1 : index
    %c0_20 = arith.constant 0 : index
    %c0_21 = arith.constant 0 : index
    %19 = vector.load %arg5[%c1, %c0_20, %c0_21] : memref<4x32x32xf32, #tpu.memory_space<vmem>>, vector<1x32x32xf32>
    %20 = vector.shape_cast %19 : vector<1x32x32xf32> to vector<32x32xf32>
    %cst_22 = arith.constant dense<0.000000e+00> : vector<8x32xf32>
    %21 = tpu.matmul %1, %20, %cst_22 {dimension_numbers = #tpu.dot_dimension_numbers<[1], [0], [0], [1], [0, 0, 1, 1], [], []>} : vector<8x32xf32>, vector<32x32xf32>, vector<8x32xf32> -> vector<8x32xf32>
    %c1_23 = arith.constant 1 : index
    %c0_24 = arith.constant 0 : index
    %c0_25 = arith.constant 0 : index
    %22 = vector.load %arg6[%c1_23, %c0_24, %c0_25] : memref<4x1x32xf32, #tpu.memory_space<vmem>>, vector<1x1x32xf32>
    %23 = vector.shape_cast %22 : vector<1x1x32xf32> to vector<1x32xf32>
    %24 = vector.broadcast %23 : vector<1x32xf32> to vector<8x32xf32>
    %25 = arith.addf %21, %24 : vector<8x32xf32>
    %cst_26 = arith.constant dense<0.000000e+00> : vector<8x8xf32>
    %26 = tpu.matmul %25, %3, %cst_26 {dimension_numbers = #tpu.dot_dimension_numbers<[1], [0], [0], [1], [0, 0, 1, 1], [], []>} : vector<8x32xf32>, vector<32x8xf32>, vector<8x8xf32> -> vector<8x8xf32>
    %c0_27 = arith.constant 0 : index
    %c1_28 = arith.constant 1 : index
    %c0_29 = arith.constant 0 : index
    %c0_30 = arith.constant 0 : index
    %27 = vector.load %arg7[%c0_27, %c1_28, %c0_29, %c0_30] : memref<1x4x8x1xf32, #tpu.memory_space<vmem>>, vector<1x1x8x1xf32>
    %28 = vector.shape_cast %27 : vector<1x1x8x1xf32> to vector<8x1xf32>
    %29 = vector.broadcast %28 : vector<8x1xf32> to vector<8x8xf32>
    %30 = arith.addf %26, %29 : vector<8x8xf32>
    %c0_31 = arith.constant 0 : index
    %c1_32 = arith.constant 1 : index
    %c0_33 = arith.constant 0 : index
    %c0_34 = arith.constant 0 : index
    %31 = vector.load %arg8[%c0_31, %c1_32, %c0_33, %c0_34] : memref<1x4x8x8xf32, #tpu.memory_space<vmem>>, vector<1x1x8x8xf32>
    %32 = vector.shape_cast %31 : vector<1x1x8x8xf32> to vector<8x8xf32>
    %33 = vector.shape_cast %30 : vector<8x8xf32> to vector<1x1x8x8xf32>
    tpu.vector_store %arg8[%c0_31, %c1_32, %c0_33, %c0_34], %33 {strides = array<i32>} : memref<1x4x8x8xf32, #tpu.memory_space<vmem>>, vector<1x1x8x8xf32>,
    %c2 = arith.constant 2 : index
    %c0_35 = arith.constant 0 : index
    %c0_36 = arith.constant 0 : index
    %34 = vector.load %arg5[%c2, %c0_35, %c0_36] : memref<4x32x32xf32, #tpu.memory_space<vmem>>, vector<1x32x32xf32>
    %35 = vector.shape_cast %34 : vector<1x32x32xf32> to vector<32x32xf32>
    %cst_37 = arith.constant dense<0.000000e+00> : vector<8x32xf32>
    %36 = tpu.matmul %1, %35, %cst_37 {dimension_numbers = #tpu.dot_dimension_numbers<[1], [0], [0], [1], [0, 0, 1, 1], [], []>} : vector<8x32xf32>, vector<32x32xf32>, vector<8x32xf32> -> vector<8x32xf32>
    %c2_38 = arith.constant 2 : index
    %c0_39 = arith.constant 0 : index
    %c0_40 = arith.constant 0 : index
    %37 = vector.load %arg6[%c2_38, %c0_39, %c0_40] : memref<4x1x32xf32, #tpu.memory_space<vmem>>, vector<1x1x32xf32>
    %38 = vector.shape_cast %37 : vector<1x1x32xf32> to vector<1x32xf32>
    %39 = vector.broadcast %38 : vector<1x32xf32> to vector<8x32xf32>
    %40 = arith.addf %36, %39 : vector<8x32xf32>
    %cst_41 = arith.constant dense<0.000000e+00> : vector<8x8xf32>
    %41 = tpu.matmul %40, %3, %cst_41 {dimension_numbers = #tpu.dot_dimension_numbers<[1], [0], [0], [1], [0, 0, 1, 1], [], []>} : vector<8x32xf32>, vector<32x8xf32>, vector<8x8xf32> -> vector<8x8xf32>
    %c0_42 = arith.constant 0 : index
    %c2_43 = arith.constant 2 : index
    %c0_44 = arith.constant 0 : index
    %c0_45 = arith.constant 0 : index
    %42 = vector.load %arg7[%c0_42, %c2_43, %c0_44, %c0_45] : memref<1x4x8x1xf32, #tpu.memory_space<vmem>>, vector<1x1x8x1xf32>
    %43 = vector.shape_cast %42 : vector<1x1x8x1xf32> to vector<8x1xf32>
    %44 = vector.broadcast %43 : vector<8x1xf32> to vector<8x8xf32>
    %45 = arith.addf %41, %44 : vector<8x8xf32>
    %c0_46 = arith.constant 0 : index
    %c2_47 = arith.constant 2 : index
    %c0_48 = arith.constant 0 : index
    %c0_49 = arith.constant 0 : index
    %46 = vector.load %arg8[%c0_46, %c2_47, %c0_48, %c0_49] : memref<1x4x8x8xf32, #tpu.memory_space<vmem>>, vector<1x1x8x8xf32>
    %47 = vector.shape_cast %46 : vector<1x1x8x8xf32> to vector<8x8xf32>
    %48 = vector.shape_cast %45 : vector<8x8xf32> to vector<1x1x8x8xf32>
    tpu.vector_store %arg8[%c0_46, %c2_47, %c0_48, %c0_49], %48 {strides = array<i32>} : memref<1x4x8x8xf32, #tpu.memory_space<vmem>>, vector<1x1x8x8xf32>,
    %c3 = arith.constant 3 : index
    %c0_50 = arith.constant 0 : index
    %c0_51 = arith.constant 0 : index
    %49 = vector.load %arg5[%c3, %c0_50, %c0_51] : memref<4x32x32xf32, #tpu.memory_space<vmem>>, vector<1x32x32xf32>
    %50 = vector.shape_cast %49 : vector<1x32x32xf32> to vector<32x32xf32>
    %cst_52 = arith.constant dense<0.000000e+00> : vector<8x32xf32>
    %51 = tpu.matmul %1, %50, %cst_52 {dimension_numbers = #tpu.dot_dimension_numbers<[1], [0], [0], [1], [0, 0, 1, 1], [], []>} : vector<8x32xf32>, vector<32x32xf32>, vector<8x32xf32> -> vector<8x32xf32>
    %c3_53 = arith.constant 3 : index
    %c0_54 = arith.constant 0 : index
    %c0_55 = arith.constant 0 : index
    %52 = vector.load %arg6[%c3_53, %c0_54, %c0_55] : memref<4x1x32xf32, #tpu.memory_space<vmem>>, vector<1x1x32xf32>
    %53 = vector.shape_cast %52 : vector<1x1x32xf32> to vector<1x32xf32>
    %54 = vector.broadcast %53 : vector<1x32xf32> to vector<8x32xf32>
    %55 = arith.addf %51, %54 : vector<8x32xf32>
    %cst_56 = arith.constant dense<0.000000e+00> : vector<8x8xf32>
    %56 = tpu.matmul %55, %3, %cst_56 {dimension_numbers = #tpu.dot_dimension_numbers<[1], [0], [0], [1], [0, 0, 1, 1], [], []>} : vector<8x32xf32>, vector<32x8xf32>, vector<8x8xf32> -> vector<8x8xf32>
    %c0_57 = arith.constant 0 : index
    %c3_58 = arith.constant 3 : index
    %c0_59 = arith.constant 0 : index
    %c0_60 = arith.constant 0 : index
    %57 = vector.load %arg7[%c0_57, %c3_58, %c0_59, %c0_60] : memref<1x4x8x1xf32, #tpu.memory_space<vmem>>, vector<1x1x8x1xf32>
    %58 = vector.shape_cast %57 : vector<1x1x8x1xf32> to vector<8x1xf32>
    %59 = vector.broadcast %58 : vector<8x1xf32> to vector<8x8xf32>
    %60 = arith.addf %56, %59 : vector<8x8xf32>
    %c0_61 = arith.constant 0 : index
    %c3_62 = arith.constant 3 : index
    %c0_63 = arith.constant 0 : index
    %c0_64 = arith.constant 0 : index
    %61 = vector.load %arg8[%c0_61, %c3_62, %c0_63, %c0_64] : memref<1x4x8x8xf32, #tpu.memory_space<vmem>>, vector<1x1x8x8xf32>
    %62 = vector.shape_cast %61 : vector<1x1x8x8xf32> to vector<8x8xf32>
    %63 = vector.shape_cast %60 : vector<8x8xf32> to vector<1x1x8x8xf32>
    tpu.vector_store %arg8[%c0_61, %c3_62, %c0_63, %c0_64], %63 {strides = array<i32>} : memref<1x4x8x8xf32, #tpu.memory_space<vmem>>, vector<1x1x8x8xf32>,
    return
  }
  func.func @transform_0(%arg0: i32, %arg1: i32, %arg2: i32) -> (i32, i32, i32) {
    %c0_i32 = arith.constant 0 : i32
    %c0_i32_0 = arith.constant 0 : i32
    return %arg0, %arg1, %c0_i32 : i32, i32, i32
  }
  func.func @transform_1(%arg0: i32, %arg1: i32, %arg2: i32) -> (i32, i32, i32) {
    %c0_i32 = arith.constant 0 : i32
    %c0_i32_0 = arith.constant 0 : i32
    return %arg0, %c0_i32, %arg2 : i32, i32, i32
  }
  func.func @transform_2(%arg0: i32, %arg1: i32, %arg2: i32) -> (i32, i32, i32) {
    %c0_i32 = arith.constant 0 : i32
    %c0_i32_0 = arith.constant 0 : i32
    %c0_i32_1 = arith.constant 0 : i32
    %c0_i32_2 = arith.constant 0 : i32
    return %c0_i32, %c0_i32_0, %c0_i32_1 : i32, i32, i32
  }
  func.func @transform_3(%arg0: i32, %arg1: i32, %arg2: i32) -> (i32, i32, i32) {
    %c0_i32 = arith.constant 0 : i32
    %c0_i32_0 = arith.constant 0 : i32
    %c0_i32_1 = arith.constant 0 : i32
    %c0_i32_2 = arith.constant 0 : i32
    return %c0_i32, %c0_i32_0, %c0_i32_1 : i32, i32, i32
  }
  func.func @transform_4(%arg0: i32, %arg1: i32, %arg2: i32) -> (i32, i32, i32, i32) {
    %c0_i32 = arith.constant 0 : i32
    %c0_i32_0 = arith.constant 0 : i32
    %c0_i32_1 = arith.constant 0 : i32
    return %arg0, %c0_i32, %arg1, %c0_i32_0 : i32, i32, i32, i32
  }
  func.func @transform_5(%arg0: i32, %arg1: i32, %arg2: i32) -> (i32, i32, i32, i32) {
    %c0_i32 = arith.constant 0 : i32
    %c0_i32_0 = arith.constant 0 : i32
    return %arg0, %c0_i32, %arg1, %arg2 : i32, i32, i32, i32
  }
}

module attributes {stable_mosaic.version = 11 : i64} {
  func.func @_biaffine_kernel(%arg0: i32, %arg1: i32, %arg2: i32, %arg3: memref<1x8x32xf32, #tpu.memory_space<vmem>>, %arg4: memref<1x32x8xf32, #tpu.memory_space<vmem>>, %arg5: memref<4x32x32xf32, #tpu.memory_space<vmem>>, %arg6: memref<4x1x32xf32, #tpu.memory_space<vmem>>, %arg7: memref<1x4x8x1xf32, #tpu.memory_space<vmem>>, %arg8: memref<1x4x8x8xf32, #tpu.memory_space<vmem>>) attributes {dimension_semantics = [#tpu.dimension_semantics<parallel>, #tpu.dimension_semantics<parallel>, #tpu.dimension_semantics<parallel>], iteration_bounds = array<i64: 2, 1, 1>, scalar_prefetch = 0 : i64, scratch_operands = 0 : i64, tpu.core_type = #tpu.core_type<tc>, window_params = [{transform_indices = @transform_0, window_bounds = array<i64: 1, 8, 32>}, {transform_indices = @transform_1, window_bounds = array<i64: 1, 32, 8>}, {pipeline_mode = #tpu.pipeline_mode<synchronous>, transform_indices = @transform_2, window_bounds = array<i64: 4, 32, 32>}, {pipeline_mode = #tpu.pipeline_mode<synchronous>, transform_indices = @transform_3, window_bounds = array<i64: 4, 1, 32>}, {transform_indices = @transform_4, window_bounds = array<i64: 1, 4, 8, 1>}, {transform_indices = @transform_5, window_bounds = array<i64: 1, 4, 8, 8>}]} {
    %c0 = arith.constant 0 : index
    %c0_0 = arith.constant 0 : index
    %c0_1 = arith.constant 0 : index
    %0 = vector.load %arg3[%c0, %c0_0, %c0_1] : memref<1x8x32xf32, #tpu.memory_space<vmem>>, vector<1x8x32xf32>
    %1 = vector.shape_cast %0 : vector<1x8x32xf32> to vector<8x32xf32>
    %c0_2 = arith.constant 0 : index
    %c0_3 = arith.constant 0 : index
    %c0_4 = arith.constant 0 : index
    %2 = vector.load %arg4[%c0_2, %c0_3, %c0_4] : memref<1x32x8xf32, #tpu.memory_space<vmem>>, vector<1x32x8xf32>
    %3 = vector.shape_cast %2 : vector<1x32x8xf32> to vector<32x8xf32>
    %c0_5 = arith.constant 0 : index
    %c0_6 = arith.constant 0 : index
    %c0_7 = arith.constant 0 : index
    %4 = vector.load %arg5[%c0_5, %c0_6, %c0_7] : memref<4x32x32xf32, #tpu.memory_space<vmem>>, vector<1x32x32xf32>
    %5 = vector.shape_cast %4 : vector<1x32x32xf32> to vector<32x32xf32>
    %cst = arith.constant dense<0.000000e+00> : vector<8x32xf32>
    %6 = tpu.matmul %1, %5, %cst {dimension_numbers = #tpu.dot_dimension_numbers<[1], [0], [0], [1], [0, 0, 1, 1], [], []>} : vector<8x32xf32>, vector<32x32xf32>, vector<8x32xf32> -> vector<8x32xf32>
    %c0_8 = arith.constant 0 : index
    %c0_9 = arith.constant 0 : index
    %c0_10 = arith.constant 0 : index
    %7 = vector.load %arg6[%c0_8, %c0_9, %c0_10] : memref<4x1x32xf32, #tpu.memory_space<vmem>>, vector<1x1x32xf32>
    %8 = vector.shape_cast %7 : vector<1x1x32xf32> to vector<1x32xf32>
    %9 = vector.broadcast %8 : vector<1x32xf32> to vector<8x32xf32>
    %10 = arith.addf %6, %9 : vector<8x32xf32>
    %cst_11 = arith.constant dense<0.000000e+00> : vector<8x8xf32>
    %11 = tpu.matmul %10, %3, %cst_11 {dimension_numbers = #tpu.dot_dimension_numbers<[1], [0], [0], [1], [0, 0, 1, 1], [], []>} : vector<8x32xf32>, vector<32x8xf32>, vector<8x8xf32> -> vector<8x8xf32>
    %c0_12 = arith.constant 0 : index
    %c0_13 = arith.constant 0 : index
    %c0_14 = arith.constant 0 : index
    %c0_15 = arith.constant 0 : index
    %12 = vector.load %arg7[%c0_12, %c0_13, %c0_14, %c0_15] : memref<1x4x8x1xf32, #tpu.memory_space<vmem>>, vector<1x1x8x1xf32>
    %13 = vector.shape_cast %12 : vector<1x1x8x1xf32> to vector<8x1xf32>
    %14 = vector.broadcast %13 : vector<8x1xf32> to vector<8x8xf32>
    %15 = arith.addf %11, %14 : vector<8x8xf32>
    %c0_16 = arith.constant 0 : index
    %c0_17 = arith.constant 0 : index
    %c0_18 = arith.constant 0 : index
    %c0_19 = arith.constant 0 : index
    %16 = vector.load %arg8[%c0_16, %c0_17, %c0_18, %c0_19] : memref<1x4x8x8xf32, #tpu.memory_space<vmem>>, vector<1x1x8x8xf32>
    %17 = vector.shape_cast %16 : vector<1x1x8x8xf32> to vector<8x8xf32>
    %18 = vector.shape_cast %15 : vector<8x8xf32> to vector<1x1x8x8xf32>
    tpu.vector_store %arg8[%c0_16, %c0_17, %c0_18, %c0_19], %18 {strides = array<i32>} : memref<1x4x8x8xf32, #tpu.memory_space<vmem>>, vector<1x1x8x8xf32>,
    %c1 = arith.constant 1 : index
    %c0_20 = arith.constant 0 : index
    %c0_21 = arith.constant 0 : index
    %19 = vector.load %arg5[%c1, %c0_20, %c0_21] : memref<4x32x32xf32, #tpu.memory_space<vmem>>, vector<1x32x32xf32>
    %20 = vector.shape_cast %19 : vector<1x32x32xf32> to vector<32x32xf32>
    %cst_22 = arith.constant dense<0.000000e+00> : vector<8x32xf32>
    %21 = tpu.matmul %1, %20, %cst_22 {dimension_numbers = #tpu.dot_dimension_numbers<[1], [0], [0], [1], [0, 0, 1, 1], [], []>} : vector<8x32xf32>, vector<32x32xf32>, vector<8x32xf32> -> vector<8x32xf32>
    %c1_23 = arith.constant 1 : index
    %c0_24 = arith.constant 0 : index
    %c0_25 = arith.constant 0 : index
    %22 = vector.load %arg6[%c1_23, %c0_24, %c0_25] : memref<4x1x32xf32, #tpu.memory_space<vmem>>, vector<1x1x32xf32>
    %23 = vector.shape_cast %22 : vector<1x1x32xf32> to vector<1x32xf32>
    %24 = vector.broadcast %23 : vector<1x32xf32> to vector<8x32xf32>
    %25 = arith.addf %21, %24 : vector<8x32xf32>
    %cst_26 = arith.constant dense<0.000000e+00> : vector<8x8xf32>
    %26 = tpu.matmul %25, %3, %cst_26 {dimension_numbers = #tpu.dot_dimension_numbers<[1], [0], [0], [1], [0, 0, 1, 1], [], []>} : vector<8x32xf32>, vector<32x8xf32>, vector<8x8xf32> -> vector<8x8xf32>
    %c0_27 = arith.constant 0 : index
    %c1_28 = arith.constant 1 : index
    %c0_29 = arith.constant 0 : index
    %c0_30 = arith.constant 0 : index
    %27 = vector.load %arg7[%c0_27, %c1_28, %c0_29, %c0_30] : memref<1x4x8x1xf32, #tpu.memory_space<vmem>>, vector<1x1x8x1xf32>
    %28 = vector.shape_cast %27 : vector<1x1x8x1xf32> to vector<8x1xf32>
    %29 = vector.broadcast %28 : vector<8x1xf32> to vector<8x8xf32>
    %30 = arith.addf %26, %29 : vector<8x8xf32>
    %c0_31 = arith.constant 0 : index
    %c1_32 = arith.constant 1 : index
    %c0_33 = arith.constant 0 : index
    %c0_34 = arith.constant 0 : index
    %31 = vector.load %arg8[%c0_31, %c1_32, %c0_33, %c0_34] : memref<1x4x8x8xf32, #tpu.memory_space<vmem>>, vector<1x1x8x8xf32>
    %32 = vector.shape_cast %31 : vector<1x1x8x8xf32> to vector<8x8xf32>
    %33 = vector.shape_cast %30 : vector<8x8xf32> to vector<1x1x8x8xf32>
    tpu.vector_store %arg8[%c0_31, %c1_32, %c0_33, %c0_34], %33 {strides = array<i32>} : memref<1x4x8x8xf32, #tpu.memory_space<vmem>>, vector<1x1x8x8xf32>,
    %c2 = arith.constant 2 : index
    %c0_35 = arith.constant 0 : index
    %c0_36 = arith.constant 0 : index
    %34 = vector.load %arg5[%c2, %c0_35, %c0_36] : memref<4x32x32xf32, #tpu.memory_space<vmem>>, vector<1x32x32xf32>
    %35 = vector.shape_cast %34 : vector<1x32x32xf32> to vector<32x32xf32>
    %cst_37 = arith.constant dense<0.000000e+00> : vector<8x32xf32>
    %36 = tpu.matmul %1, %35, %cst_37 {dimension_numbers = #tpu.dot_dimension_numbers<[1], [0], [0], [1], [0, 0, 1, 1], [], []>} : vector<8x32xf32>, vector<32x32xf32>, vector<8x32xf32> -> vector<8x32xf32>
    %c2_38 = arith.constant 2 : index
    %c0_39 = arith.constant 0 : index
    %c0_40 = arith.constant 0 : index
    %37 = vector.load %arg6[%c2_38, %c0_39, %c0_40] : memref<4x1x32xf32, #tpu.memory_space<vmem>>, vector<1x1x32xf32>
    %38 = vector.shape_cast %37 : vector<1x1x32xf32> to vector<1x32xf32>
    %39 = vector.broadcast %38 : vector<1x32xf32> to vector<8x32xf32>
    %40 = arith.addf %36, %39 : vector<8x32xf32>
    %cst_41 = arith.constant dense<0.000000e+00> : vector<8x8xf32>
    %41 = tpu.matmul %40, %3, %cst_41 {dimension_numbers = #tpu.dot_dimension_numbers<[1], [0], [0], [1], [0, 0, 1, 1], [], []>} : vector<8x32xf32>, vector<32x8xf32>, vector<8x8xf32> -> vector<8x8xf32>
    %c0_42 = arith.constant 0 : index
    %c2_43 = arith.constant 2 : index
    %c0_44 = arith.constant 0 : index
    %c0_45 = arith.constant 0 : index
    %42 = vector.load %arg7[%c0_42, %c2_43, %c0_44, %c0_45] : memref<1x4x8x1xf32, #tpu.memory_space<vmem>>, vector<1x1x8x1xf32>
    %43 = vector.shape_cast %42 : vector<1x1x8x1xf32> to vector<8x1xf32>
    %44 = vector.broadcast %43 : vector<8x1xf32> to vector<8x8xf32>
    %45 = arith.addf %41, %44 : vector<8x8xf32>
    %c0_46 = arith.constant 0 : index
    %c2_47 = arith.constant 2 : index
    %c0_48 = arith.constant 0 : index
    %c0_49 = arith.constant 0 : index
    %46 = vector.load %arg8[%c0_46, %c2_47, %c0_48, %c0_49] : memref<1x4x8x8xf32, #tpu.memory_space<vmem>>, vector<1x1x8x8xf32>
    %47 = vector.shape_cast %46 : vector<1x1x8x8xf32> to vector<8x8xf32>
    %48 = vector.shape_cast %45 : vector<8x8xf32> to vector<1x1x8x8xf32>
    tpu.vector_store %arg8[%c0_46, %c2_47, %c0_48, %c0_49], %48 {strides = array<i32>} : memref<1x4x8x8xf32, #tpu.memory_space<vmem>>, vector<1x1x8x8xf32>,
    %c3 = arith.constant 3 : index
    %c0_50 = arith.constant 0 : index
    %c0_51 = arith.constant 0 : index
    %49 = vector.load %arg5[%c3, %c0_50, %c0_51] : memref<4x32x32xf32, #tpu.memory_space<vmem>>, vector<1x32x32xf32>
    %50 = vector.shape_cast %49 : vector<1x32x32xf32> to vector<32x32xf32>
    %cst_52 = arith.constant dense<0.000000e+00> : vector<8x32xf32>
    %51 = tpu.matmul %1, %50, %cst_52 {dimension_numbers = #tpu.dot_dimension_numbers<[1], [0], [0], [1], [0, 0, 1, 1], [], []>} : vector<8x32xf32>, vector<32x32xf32>, vector<8x32xf32> -> vector<8x32xf32>
    %c3_53 = arith.constant 3 : index
    %c0_54 = arith.constant 0 : index
    %c0_55 = arith.constant 0 : index
    %52 = vector.load %arg6[%c3_53, %c0_54, %c0_55] : memref<4x1x32xf32, #tpu.memory_space<vmem>>, vector<1x1x32xf32>
    %53 = vector.shape_cast %52 : vector<1x1x32xf32> to vector<1x32xf32>
    %54 = vector.broadcast %53 : vector<1x32xf32> to vector<8x32xf32>
    %55 = arith.addf %51, %54 : vector<8x32xf32>
    %cst_56 = arith.constant dense<0.000000e+00> : vector<8x8xf32>
    %56 = tpu.matmul %55, %3, %cst_56 {dimension_numbers = #tpu.dot_dimension_numbers<[1], [0], [0], [1], [0, 0, 1, 1], [], []>} : vector<8x32xf32>, vector<32x8xf32>, vector<8x8xf32> -> vector<8x8xf32>
    %c0_57 = arith.constant 0 : index
    %c3_58 = arith.constant 3 : index
    %c0_59 = arith.constant 0 : index
    %c0_60 = arith.constant 0 : index
    %57 = vector.load %arg7[%c0_57, %c3_58, %c0_59, %c0_60] : memref<1x4x8x1xf32, #tpu.memory_space<vmem>>, vector<1x1x8x1xf32>
    %58 = vector.shape_cast %57 : vector<1x1x8x1xf32> to vector<8x1xf32>
    %59 = vector.broadcast %58 : vector<8x1xf32> to vector<8x8xf32>
    %60 = arith.addf %56, %59 : vector<8x8xf32>
    %c0_61 = arith.constant 0 : index
    %c3_62 = arith.constant 3 : index
    %c0_63 = arith.constant 0 : index
    %c0_64 = arith.constant 0 : index
    %61 = vector.load %arg8[%c0_61, %c3_62, %c0_63, %c0_64] : memref<1x4x8x8xf32, #tpu.memory_space<vmem>>, vector<1x1x8x8xf32>
    %62 = vector.shape_cast %61 : vector<1x1x8x8xf32> to vector<8x8xf32>
    %63 = vector.shape_cast %60 : vector<8x8xf32> to vector<1x1x8x8xf32>
    tpu.vector_store %arg8[%c0_61, %c3_62, %c0_63, %c0_64], %63 {strides = array<i32>} : memref<1x4x8x8xf32, #tpu.memory_space<vmem>>, vector<1x1x8x8xf32>,
    return
  }
  func.func @transform_0(%arg0: i32, %arg1: i32, %arg2: i32) -> (i32, i32, i32) {
    %c0_i32 = arith.constant 0 : i32
    %c0_i32_0 = arith.constant 0 : i32
    return %arg0, %arg1, %c0_i32 : i32, i32, i32
  }
  func.func @transform_1(%arg0: i32, %arg1: i32, %arg2: i32) -> (i32, i32, i32) {
    %c0_i32 = arith.constant 0 : i32
    %c0_i32_0 = arith.constant 0 : i32
    return %arg0, %c0_i32, %arg2 : i32, i32, i32
  }
  func.func @transform_2(%arg0: i32, %arg1: i32, %arg2: i32) -> (i32, i32, i32) {
    %c0_i32 = arith.constant 0 : i32
    %c0_i32_0 = arith.constant 0 : i32
    %c0_i32_1 = arith.constant 0 : i32
    %c0_i32_2 = arith.constant 0 : i32
    return %c0_i32, %c0_i32_0, %c0_i32_1 : i32, i32, i32
  }
  func.func @transform_3(%arg0: i32, %arg1: i32, %arg2: i32) -> (i32, i32, i32) {
    %c0_i32 = arith.constant 0 : i32
    %c0_i32_0 = arith.constant 0 : i32
    %c0_i32_1 = arith.constant 0 : i32
    %c0_i32_2 = arith.constant 0 : i32
    return %c0_i32, %c0_i32_0, %c0_i32_1 : i32, i32, i32
  }
  func.func @transform_4(%arg0: i32, %arg1: i32, %arg2: i32) -> (i32, i32, i32, i32) {
    %c0_i32 = arith.constant 0 : i32
    %c0_i32_0 = arith.constant 0 : i32
    %c0_i32_1 = arith.constant 0 : i32
    return %arg0, %c0_i32, %arg1, %c0_i32_0 : i32, i32, i32, i32
  }
  func.func @transform_5(%arg0: i32, %arg1: i32, %arg2: i32) -> (i32, i32, i32, i32) {
    %c0_i32 = arith.constant 0 : i32
    %c0_i32_0 = arith.constant 0 : i32
    return %arg0, %c0_i32, %arg1, %arg2 : i32, i32, i32, i32
  }
}

</mosaic_0001>

<llo_original>
// kernel: tpu_custom_call.1
$region0: #{tpu_custom_call.1}
  #allocation0 [shape = 'u32[]', space=smem, size = 0x4, offset = 0x4, fixed_abs, tag = 'smem constant byte address 0x4 - core index']
  #allocation1 [shape = 'u32[144,128]{1,0:T(1,128)}', space=vmem, size = 0x12000, scoped, tag = 'internal scratch']
  %s0 = inlined_call_operand.vmem [shape: f32[2,8,32], index: 0, kind: input, shape index: {}]
  %s1 = inlined_call_operand.vmem [shape: f32[2,32,8], index: 1, kind: input, shape index: {}]
  %s2 = inlined_call_operand.vmem [shape: f32[4,32,32], index: 2, kind: input, shape index: {}]
  %s3 = inlined_call_operand.vmem [shape: f32[4,1,32], index: 3, kind: input, shape index: {}]
  %s4 = inlined_call_operand.vmem [shape: f32[2,4,8,1], index: 4, kind: input, shape index: {}]
  %s5 = inlined_call_operand.hbm [shape: f32[2,4,8,8], index: 5, kind: output, shape index: {}]
  %s6 = sld [smem:[#allocation0]]
  $region53: #{tpu_custom_call.1} parent=0
    _
  %s8 = ssub.s32 1, %s6
  %s9 = scalar_select 0, %s8, %s6
  $region1: #{tpu_custom_call.1} parent=0
    #allocation2 [shape = 'u8[32768]{0}', space=vmem, size = 0x8000, scoped, tag = 'output window, operand 0']
    #allocation3 [shape = 's32[2]{0}', space=sflag, size = 0x8, scoped, tag = 'scoped memory for tpu_custom_call.1']
    %10 = vsyncpa [#allocation3], 0
    %s11 = scalar_lea.sflag [#allocation3], 1
    %12 = vsyncpa %s11, 0
    loop: start=0, step=1, limit=4
    $region2: #{tpu_custom_call.1} parent=1 // loop_pre_header
      _
    $region3: #{tpu_custom_call.1} parent=1 // loop_header
      %s14 = sphi 0, %s18
      %p15 = scmp.ge.s32.totalorder %s14, 4
      %s21 = sphi 0, %s40
      %s22 = sphi 0, %s36
      %s23 = sphi 0, %s32
      %s24 = sphi 0, %s21
      %s25 = sphi 0, %s22
      %s26 = sphi 0, %s23
      %s27 = sphi 0, %s24
      %s28 = sphi 0, %s25
      %s29 = sphi 0, %s26
      %s45 = sphi 0, %s47
      %s48 = sphi 0, %s45
      %s49 = sphi 0, %s48
      %s65 = sphi 0, %s49
      %s73 = sphi 0, %s75
      %s76 = sphi 0, %s73
      %s77 = sphi 0, %s76
      %s93 = sphi 0, %s77
      %s97 = sphi 0, %s97
      %s99 = sphi 0, %s97
      %s100 = sphi 0, %s99
      %s114 = sphi 0, %s100
      %s118 = sphi 0, %s118
      %s120 = sphi 0, %s118
      %s121 = sphi 0, %s120
      %s135 = sphi 0, %s121
      %s143 = sphi 0, %s145
      %s146 = sphi 0, %s143
      %s147 = sphi 0, %s146
      %s163 = sphi 0, %s147
      %s173 = sphi 0, %s175
      %s176 = sphi 0, %s173
      %s177 = sphi 0, %s176
      %s193 = sphi 0, %s177
    $region4: #{tpu_custom_call.1} parent=1 // loop_header_branch
      %17 = sbr.rel (%p15) target = $region8
    $region5: #{tpu_custom_call.1} parent=1 // loop_body
      %s19 = ssub.s32 %s14, 1
      %s20 = ssub.s32 %s14, 2
      %s30 = sadd.s32 1, %s23
      %p31 = scmp.ge.s32.totalorder %s30, 1
      %s32 = scalar_select %p31, 0, %s30
      %s33 = sadd.s32 1, %s22
      %s34 = scalar_select %p31, %s33, %s22
      %p35 = scmp.ge.s32.totalorder %s34, 1
      %s36 = scalar_select %p35, 0, %s34
      %s37 = sadd.s32 1, %s21
      %s38 = scalar_select %p35, %s37, %s21
      %p39 = scmp.ge.s32.totalorder %s38, 2
      %s40 = scalar_select %p39, 0, %s38
      %s41 = ssub.s32 %s21, %s40
      %s42 = ssub.s32 %s22, %s36
      %s43 = sor.u32 %s41, %s42
      %p44 = scmp.eq.s32.totalorder %s43, 0
      %s46 = sadd.s32 %s45, 1
      %s47 = scalar_select %p44, %s45, %s46
      %p50 = pneg %p44
      %p51 = scmp.eq.s32.totalorder %s14, 1
      %p52 = por %p50, %p51
      %p53 = scmp.ne.s32.totalorder %s45, %s48
      %p54 = scmp.eq.s32.totalorder %s14, 0
      %p55 = por %p53, %p54
      %p56 = scmp.ne.s32.totalorder %s45, %s48
      %p57 = scmp.eq.s32.totalorder %s19, 1
      %p58 = por %p56, %p57
      %p59 = scmp.ne.s32.totalorder %s48, %s49
      %p60 = scmp.eq.s32.totalorder %s19, 0
      %p61 = por %p59, %p60
      %p62 = scmp.ne.s32.totalorder %s48, %s49
      %p63 = scmp.eq.s32.totalorder %s20, 1
      %p64 = por %p62, %p63
      %p66 = scmp.ne.s32.totalorder %s49, %s65
      %p67 = scmp.eq.s32.totalorder %s20, 0
      %p68 = por %p66, %p67
      %s69 = ssub.s32 %s21, %s40
      %s70 = ssub.s32 %s23, %s32
      %s71 = sor.u32 %s69, %s70
      %p72 = scmp.eq.s32.totalorder %s71, 0
      %s74 = sadd.s32 %s73, 1
      %s75 = scalar_select %p72, %s73, %s74
      %p78 = pneg %p72
      %p79 = scmp.eq.s32.totalorder %s14, 1
      %p80 = por %p78, %p79
      %p81 = scmp.ne.s32.totalorder %s73, %s76
      %p82 = scmp.eq.s32.totalorder %s14, 0
      %p83 = por %p81, %p82
      %p84 = scmp.ne.s32.totalorder %s73, %s76
      %p85 = scmp.eq.s32.totalorder %s19, 1
      %p86 = por %p84, %p85
      %p87 = scmp.ne.s32.totalorder %s76, %s77
      %p88 = scmp.eq.s32.totalorder %s19, 0
      %p89 = por %p87, %p88
      %p90 = scmp.ne.s32.totalorder %s76, %s77
      %p91 = scmp.eq.s32.totalorder %s20, 1
      %p92 = por %p90, %p91
      %p94 = scmp.ne.s32.totalorder %s77, %s93
      %p95 = scmp.eq.s32.totalorder %s20, 0
      %p96 = por %p94, %p95
      %s98 = sadd.s32 %s97, 1
      %p101 = scmp.eq.s32.totalorder %s14, 1
      %p102 = scmp.ne.s32.totalorder %s97, %s99
      %p103 = scmp.eq.s32.totalorder %s14, 0
      %p104 = por %p102, %p103
      %p105 = scmp.ne.s32.totalorder %s97, %s99
      %p106 = scmp.eq.s32.totalorder %s19, 1
      %p107 = por %p105, %p106
      %p108 = scmp.ne.s32.totalorder %s99, %s100
      %p109 = scmp.eq.s32.totalorder %s19, 0
      %p110 = por %p108, %p109
      %p111 = scmp.ne.s32.totalorder %s99, %s100
      %p112 = scmp.eq.s32.totalorder %s20, 1
      %p113 = por %p111, %p112
      %p115 = scmp.ne.s32.totalorder %s100, %s114
      %p116 = scmp.eq.s32.totalorder %s20, 0
      %p117 = por %p115, %p116
      %s119 = sadd.s32 %s118, 1
      %p122 = scmp.eq.s32.totalorder %s14, 1
      %p123 = scmp.ne.s32.totalorder %s118, %s120
      %p124 = scmp.eq.s32.totalorder %s14, 0
      %p125 = por %p123, %p124
      %p126 = scmp.ne.s32.totalorder %s118, %s120
      %p127 = scmp.eq.s32.totalorder %s19, 1
      %p128 = por %p126, %p127
      %p129 = scmp.ne.s32.totalorder %s120, %s121
      %p130 = scmp.eq.s32.totalorder %s19, 0
      %p131 = por %p129, %p130
      %p132 = scmp.ne.s32.totalorder %s120, %s121
      %p133 = scmp.eq.s32.totalorder %s20, 1
      %p134 = por %p132, %p133
      %p136 = scmp.ne.s32.totalorder %s121, %s135
      %p137 = scmp.eq.s32.totalorder %s20, 0
      %p138 = por %p136, %p137
      %s139 = ssub.s32 %s21, %s40
      %s140 = ssub.s32 %s22, %s36
      %s141 = sor.u32 %s139, %s140
      %p142 = scmp.eq.s32.totalorder %s141, 0
      %s144 = sadd.s32 %s143, 1
      %s145 = scalar_select %p142, %s143, %s144
      %p148 = pneg %p142
      %p149 = scmp.eq.s32.totalorder %s14, 1
      %p150 = por %p148, %p149
      %p151 = scmp.ne.s32.totalorder %s143, %s146
      %p152 = scmp.eq.s32.totalorder %s14, 0
      %p153 = por %p151, %p152
      %p154 = scmp.ne.s32.totalorder %s143, %s146
      %p155 = scmp.eq.s32.totalorder %s19, 1
      %p156 = por %p154, %p155
      %p157 = scmp.ne.s32.totalorder %s146, %s147
      %p158 = scmp.eq.s32.totalorder %s19, 0
      %p159 = por %p157, %p158
      %p160 = scmp.ne.s32.totalorder %s146, %s147
      %p161 = scmp.eq.s32.totalorder %s20, 1
      %p162 = por %p160, %p161
      %p164 = scmp.ne.s32.totalorder %s147, %s163
      %p165 = scmp.eq.s32.totalorder %s20, 0
      %p166 = por %p164, %p165
      %s167 = ssub.s32 %s21, %s40
      %s168 = ssub.s32 %s22, %s36
      %s169 = sor.u32 %s167, %s168
      %s170 = ssub.s32 %s23, %s32
      %s171 = sor.u32 %s169, %s170
      %p172 = scmp.eq.s32.totalorder %s171, 0
      %s174 = sadd.s32 %s173, 1
      %s175 = scalar_select %p172, %s173, %s174
      %p178 = pneg %p172
      %p179 = scmp.eq.s32.totalorder %s14, 1
      %p180 = por %p178, %p179
      %p181 = scmp.ne.s32.totalorder %s173, %s176
      %p182 = scmp.eq.s32.totalorder %s14, 0
      %p183 = por %p181, %p182
      %p184 = scmp.ne.s32.totalorder %s173, %s176
      %p185 = scmp.eq.s32.totalorder %s19, 1
      %p186 = por %p184, %p185
      %p187 = scmp.ne.s32.totalorder %s176, %s177
      %p188 = scmp.eq.s32.totalorder %s19, 0
      %p189 = por %p187, %p188
      %p190 = scmp.ne.s32.totalorder %s176, %s177
      %p191 = scmp.eq.s32.totalorder %s20, 1
      %p192 = por %p190, %p191
      %p194 = scmp.ne.s32.totalorder %s177, %s193
      %p195 = scmp.eq.s32.totalorder %s20, 0
      %p196 = por %p194, %p195
      %p197 = scmp.le.s32.totalorder 1, %s14
      %p198 = scmp.lt.s32.totalorder %s14, 3
      %p199 = pnand %p197, %p198
      %p200 = pneg %p199
      // Predicated region
      $region9: #{tpu_custom_call.1} parent=5 // pred_check
        _
      $region10: #{tpu_custom_call.1} parent=5 // pred_check_branch
        %202 = sbr.rel (%p199) target = $region12
      $region11: #{tpu_custom_call.1} parent=5 // pred_region
        %s203 = ssub.s32 %s14, 1
        // Predicated region
        $region13: #{tpu_custom_call.1} parent=11 // pred_check
          %p204 = pneg %p110
        $region14: #{tpu_custom_call.1} parent=11 // pred_check_branch
          %206 = sbr.rel (%p204) target = $region16
        $region15: #{tpu_custom_call.1} parent=11 // pred_region
          _
        $region16: #{tpu_custom_call.1} parent=11 // pred_fallthru
          _
        // Predicated region
        $region17: #{tpu_custom_call.1} parent=11 // pred_check
          %p207 = pneg %p131
        $region18: #{tpu_custom_call.1} parent=11 // pred_check_branch
          %209 = sbr.rel (%p207) target = $region20
        $region19: #{tpu_custom_call.1} parent=11 // pred_region
          _
        $region20: #{tpu_custom_call.1} parent=11 // pred_fallthru
          _
      $region12: #{tpu_custom_call.1} parent=5 // pred_fallthru
        _
      %p210 = scmp.lt.s32.totalorder %s14, 2
      // Predicated region
      $region21: #{tpu_custom_call.1} parent=5 // pred_check
        %p211 = pneg %p210
      $region22: #{tpu_custom_call.1} parent=5 // pred_check_branch
        %213 = sbr.rel (%p211) target = $region24
      $region23: #{tpu_custom_call.1} parent=5 // pred_region
        // Predicated region
        $region25: #{tpu_custom_call.1} parent=23 // pred_check
          %p214 = pneg %p55
        $region26: #{tpu_custom_call.1} parent=23 // pred_check_branch
          %216 = sbr.rel (%p214) target = $region28
        $region27: #{tpu_custom_call.1} parent=23 // pred_region
          %p217 = scmp.lt.s32.totalorder %s21, 1
          %s218 = scalar_select %p217, %s21, 1
          %p219 = scmp.lt.s32.totalorder %s22, 0
          %s220 = scalar_select %p219, %s22, 0
          %s221 = sadd.s32 %s220, %s218
          %s222 = smul.addr %s221, 8
          %s223 = scalar_lea.vmem %s0, %s222
        $region28: #{tpu_custom_call.1} parent=23 // pred_fallthru
          _
        // Predicated region
        $region29: #{tpu_custom_call.1} parent=23 // pred_check
          %p224 = pneg %p83
        $region30: #{tpu_custom_call.1} parent=23 // pred_check_branch
          %226 = sbr.rel (%p224) target = $region32
        $region31: #{tpu_custom_call.1} parent=23 // pred_region
          %p227 = scmp.lt.s32.totalorder %s21, 1
          %s228 = scalar_select %p227, %s21, 1
          %p229 = scmp.lt.s32.totalorder %s23, 0
          %s230 = scalar_select %p229, %s23, 0
          %s231 = smul.addr %s228, 4
          %s232 = sadd.s32 %s230, %s231
          %s233 = smul.addr %s232, 8
          %s234 = scalar_lea.vmem %s1, %s233
        $region32: #{tpu_custom_call.1} parent=23 // pred_fallthru
          _
        // Predicated region
        $region33: #{tpu_custom_call.1} parent=23 // pred_check
          %p235 = pneg %p153
        $region34: #{tpu_custom_call.1} parent=23 // pred_check_branch
          %237 = sbr.rel (%p235) target = $region36
        $region35: #{tpu_custom_call.1} parent=23 // pred_region
          %p238 = scmp.lt.s32.totalorder %s21, 1
          %s239 = scalar_select %p238, %s21, 1
          %p240 = scmp.lt.s32.totalorder %s22, 0
          %s241 = scalar_select %p240, %s22, 0
          %s242 = smul.addr %s239, 4
          %s243 = sadd.s32 %s241, %s242
          %s244 = smul.addr %s243, 8
          %s245 = scalar_lea.vmem %s4, %s244
        $region36: #{tpu_custom_call.1} parent=23 // pred_fallthru
          _
      $region24: #{tpu_custom_call.1} parent=5 // pred_fallthru
        _
      %p246 = scmp.le.s32.totalorder 1, %s14
      %p247 = scmp.lt.s32.totalorder %s14, 3
      %p248 = pnand %p246, %p247
      %p249 = pneg %p248
      // Predicated region
      $region37: #{tpu_custom_call.1} parent=5 // pred_check
        _
      $region38: #{tpu_custom_call.1} parent=5 // pred_check_branch
        %251 = sbr.rel (%p248) target = $region40
      $region39: #{tpu_custom_call.1} parent=5 // pred_region
        %s252 = ssub.s32 %s14, 1
        %p253 = scmp.lt.s32.totalorder %s24, 1
        %s254 = scalar_select %p253, %s24, 1
        %p255 = scmp.lt.s32.totalorder %s25, 0
        %s256 = scalar_select %p255, %s25, 0
        %s257 = sadd.s32 %s256, %s254
        %s258 = smul.addr %s257, 8
        %s259 = scalar_lea.vmem %s0, %s258
        %p260 = pneg %p61
        %p261 = pneg %p58
        %p262 = scmp.lt.s32.totalorder %s24, 1
        %s263 = scalar_select %p262, %s24, 1
        %p264 = scmp.lt.s32.totalorder %s26, 0
        %s265 = scalar_select %p264, %s26, 0
        %s266 = smul.addr %s263, 4
        %s267 = sadd.s32 %s265, %s266
        %s268 = smul.addr %s267, 8
        %s269 = scalar_lea.vmem %s1, %s268
        %p270 = pneg %p89
        %p271 = pneg %p86
        %p272 = pneg %p110
        %p273 = pneg %p107
        %p274 = pneg %p131
        %p275 = pneg %p128
        %p276 = scmp.lt.s32.totalorder %s24, 1
        %s277 = scalar_select %p276, %s24, 1
        %p278 = scmp.lt.s32.totalorder %s25, 0
        %s279 = scalar_select %p278, %s25, 0
        %s280 = smul.addr %s277, 4
        %s281 = sadd.s32 %s279, %s280
        %s282 = smul.addr %s281, 8
        %s283 = scalar_lea.vmem %s4, %s282
        %p284 = pneg %p159
        %p285 = pneg %p156
        %p286 = pneg %p189
        %p287 = pneg %p186
        %s288 = sand.u32 %s176, 1
        %s289 = scalar_lea.sflag [#allocation3], %s288
        %s290 = sand.u32 %s176, 1
        %s291 = smul.addr %s290, 32
        %s292 = scalar_lea.vmem [#allocation2], %s291
        %p293 = scmp.lt.s32.totalorder %s24, 1
        %s294 = scalar_select %p293, %s24, 1
        %p295 = scmp.lt.s32.totalorder %s25, 0
        %s296 = scalar_select %p295, %s25, 0
        %s297 = sadd.s32 %s296, %s294
        %s298 = smul.addr %s297, 8
        %s299 = scalar_lea.vmem %s0, %s298
        %p300 = scmp.lt.s32.totalorder %s24, 1
        %s301 = scalar_select %p300, %s24, 1
        %p302 = scmp.lt.s32.totalorder %s26, 0
        %s303 = scalar_select %p302, %s26, 0
        %s304 = smul.addr %s301, 4
        %s305 = sadd.s32 %s303, %s304
        %s306 = smul.addr %s305, 8
        %s307 = scalar_lea.vmem %s1, %s306
        %p308 = scmp.lt.s32.totalorder %s24, 1
        %s309 = scalar_select %p308, %s24, 1
        %p310 = scmp.lt.s32.totalorder %s25, 0
        %s311 = scalar_select %p310, %s25, 0
        %s312 = smul.addr %s309, 4
        %s313 = sadd.s32 %s311, %s312
        %s314 = smul.addr %s313, 8
        %s315 = scalar_lea.vmem %s4, %s314
        %v316 = vld [vmem:[%s299] sm:$0xff]
        %v317 = vld [vmem:[%s307] sm:$0xff]
        %v318 = vld [vmem:[%s307 + $0x8] sm:$0xff]
        %v319 = vld [vmem:[%s307 + $0x10] sm:$0xff]
        %v320 = vld [vmem:[%s307 + $0x18] sm:$0xff]
        %v321 = vld [vmem:[%s2] sm:$0xff]
        %v322 = vld [vmem:[%s2 + $0x8] sm:$0xff]
        %v323 = vld [vmem:[%s2 + $0x10] sm:$0xff]
        %v324 = vld [vmem:[%s2 + $0x18] sm:$0xff]
        %v325 = vld [vmem:[%s3] sm:$0x1]
        %v327 = vlaneseq
        %v328 = vshrl.u32 %v327, 7
        %v329 = vsub.s32 0, %v328
        %v330 = vrot.slane %v325, %v329
        %vm332 = vcmask 261120
        %v334 = vsel %vm332, %v316, 0
        %336 = vmatprep.subr.mxu0 0.0
        %337 = vmatpush1.msra.mxu0 0.0
        %338 = vmatprep.subr.mxu0 0.0
        %339 = vmatpush1.msra.mxu0 0.0
        %340 = vmatprep.subr.mxu0 0.0
        %341 = vmatpush1.msra.mxu0 0.0
        %342 = vmatprep.subr.mxu0 0.0
        %343 = vmatpush1.msra.mxu0 0.0
        %344 = vmatprep.subr.mxu0 0.0
        %345 = vmatpush1.msra.mxu0 0.0
        %346 = vmatprep.subr.mxu0 0.0
        %347 = vmatpush1.msra.mxu0 0.0
        %348 = vmatprep.subr.mxu0 0.0
        %349 = vmatpush1.msra.mxu0 0.0
        %350 = vmatprep.subr.mxu0 0.0
        %351 = vmatpush1.msra.mxu0 0.0
        %352 = vmatprep.subr.mxu0 0.0
        %353 = vmatpush1.msra.mxu0 0.0
        %354 = vmatprep.subr.mxu0 0.0
        %355 = vmatpush1.msra.mxu0 0.0
        %356 = vmatprep.subr.mxu0 0.0
        %357 = vmatpush1.msra.mxu0 0.0
        %358 = vmatprep.subr.mxu0 0.0
        %359 = vmatpush1.msra.mxu0 0.0
        %360 = vmatprep.subr.mxu0 0.0
        %361 = vmatpush1.msra.mxu0 %v324
        %362 = vmatprep.subr.mxu0 0.0
        %363 = vmatpush1.msra.mxu0 %v323
        %364 = vmatprep.subr.mxu0 0.0
        %365 = vmatpush1.msra.mxu0 %v322
        %366 = vmatprep.subr.mxu0 0.0
        %367 = vmatpush1.msra.mxu0 %v321
        %368 = vmatprep.subr.mxu0 0.0
        %369 = vmatpush2.msra.mxu0 0.0
        %370 = vmatprep.subr.mxu0 0.0
        %371 = vmatpush2.msra.mxu0 0.0
        %372 = vmatprep.subr.mxu0 0.0
        %373 = vmatpush2.msra.mxu0 0.0
        %374 = vmatprep.subr.mxu0 0.0
        %375 = vmatpush2.msra.mxu0 0.0
        %376 = vmatprep.subr.mxu0 0.0
        %377 = vmatpush2.msra.mxu0 0.0
        %378 = vmatprep.subr.mxu0 0.0
        %379 = vmatpush2.msra.mxu0 0.0
        %380 = vmatprep.subr.mxu0 0.0
        %381 = vmatpush2.msra.mxu0 0.0
        %382 = vmatprep.subr.mxu0 0.0
        %383 = vmatpush2.msra.mxu0 0.0
        %384 = vmatprep.subr.mxu0 0.0
        %385 = vmatpush2.msra.mxu0 0.0
        %386 = vmatprep.subr.mxu0 0.0
        %387 = vmatpush2.msra.mxu0 0.0
        %388 = vmatprep.subr.mxu0 0.0
        %389 = vmatpush2.msra.mxu0 0.0
        %390 = vmatprep.subr.mxu0 0.0
        %391 = vmatpush2.msra.mxu0 0.0
        %392 = vmatprep.subr.mxu0 0.0
        %393 = vmatpush2.msra.mxu0 0.0
        %394 = vmatprep.subr.mxu0 0.0
        %395 = vmatpush2.msra.mxu0 0.0
        %396 = vmatprep.subr.mxu0 0.0
        %397 = vmatpush2.msra.mxu0 0.0
        %398 = vmatprep.subr.mxu0 0.0
        %399 = vmatpush2.msra.mxu0 0.0
        %400 = vmatprep.mubr.f32.mxu0 0.0
        %401 = vmatmul.mubr.f32.gmra.mxu0 %v334
        %v402 = vpop.f32.mrf.mxu0
        %v403 = vadd.f32 %v330, %v402
        %v404 = vpop.f32.mrf.mxu0
        %405 = vdwg.mxu0
        %v406 = vld [vmem:[%s315] sm:$0xff]
        %408 = vset.pattern.permute.xlu0 0
        %409 = vperm.xlu0 %408, %v406
        %v410 = vpop.permute.xlu0 %409
        %v413 = vsel %vm332, %v403, 0
        %415 = vmatprep.subr.mxu0 0.0
        %416 = vmatpush1.msra.mxu0 0.0
        %417 = vmatprep.subr.mxu0 0.0
        %418 = vmatpush1.msra.mxu0 0.0
        %419 = vmatprep.subr.mxu0 0.0
        %420 = vmatpush1.msra.mxu0 0.0
        %421 = vmatprep.subr.mxu0 0.0
        %422 = vmatpush1.msra.mxu0 0.0
        %423 = vmatprep.subr.mxu0 0.0
        %424 = vmatpush1.msra.mxu0 0.0
        %425 = vmatprep.subr.mxu0 0.0
        %426 = vmatpush1.msra.mxu0 0.0
        %427 = vmatprep.subr.mxu0 0.0
        %428 = vmatpush1.msra.mxu0 0.0
        %429 = vmatprep.subr.mxu0 0.0
        %430 = vmatpush1.msra.mxu0 0.0
        %431 = vmatprep.subr.mxu0 0.0
        %432 = vmatpush1.msra.mxu0 0.0
        %433 = vmatprep.subr.mxu0 0.0
        %434 = vmatpush1.msra.mxu0 0.0
        %435 = vmatprep.subr.mxu0 0.0
        %436 = vmatpush1.msra.mxu0 0.0
        %437 = vmatprep.subr.mxu0 0.0
        %438 = vmatpush1.msra.mxu0 0.0
        %439 = vmatprep.subr.mxu0 0.0
        %440 = vmatpush1.msra.mxu0 %v320
        %441 = vmatprep.subr.mxu0 0.0
        %442 = vmatpush1.msra.mxu0 %v319
        %443 = vmatprep.subr.mxu0 0.0
        %444 = vmatpush1.msra.mxu0 %v318
        %445 = vmatprep.subr.mxu0 0.0
        %446 = vmatpush1.msra.mxu0 %v317
        %447 = vmatprep.subr.mxu0 0.0
        %448 = vmatpush2.msra.mxu0 0.0
        %449 = vmatprep.subr.mxu0 0.0
        %450 = vmatpush2.msra.mxu0 0.0
        %451 = vmatprep.subr.mxu0 0.0
        %452 = vmatpush2.msra.mxu0 0.0
        %453 = vmatprep.subr.mxu0 0.0
        %454 = vmatpush2.msra.mxu0 0.0
        %455 = vmatprep.subr.mxu0 0.0
        %456 = vmatpush2.msra.mxu0 0.0
        %457 = vmatprep.subr.mxu0 0.0
        %458 = vmatpush2.msra.mxu0 0.0
        %459 = vmatprep.subr.mxu0 0.0
        %460 = vmatpush2.msra.mxu0 0.0
        %461 = vmatprep.subr.mxu0 0.0
        %462 = vmatpush2.msra.mxu0 0.0
        %463 = vmatprep.subr.mxu0 0.0
        %464 = vmatpush2.msra.mxu0 0.0
        %465 = vmatprep.subr.mxu0 0.0
        %466 = vmatpush2.msra.mxu0 0.0
        %467 = vmatprep.subr.mxu0 0.0
        %468 = vmatpush2.msra.mxu0 0.0
        %469 = vmatprep.subr.mxu0 0.0
        %470 = vmatpush2.msra.mxu0 0.0
        %471 = vmatprep.subr.mxu0 0.0
        %472 = vmatpush2.msra.mxu0 0.0
        %473 = vmatprep.subr.mxu0 0.0
        %474 = vmatpush2.msra.mxu0 0.0
        %475 = vmatprep.subr.mxu0 0.0
        %476 = vmatpush2.msra.mxu0 0.0
        %477 = vmatprep.subr.mxu0 0.0
        %478 = vmatpush2.msra.mxu0 0.0
        %479 = vmatprep.mubr.f32.mxu0 0.0
        %480 = vmatmul.mubr.f32.gmra.mxu0 %v413
        %v481 = vpop.f32.mrf.mxu0
        %v482 = vadd.f32 %v410, %v481
        %v483 = vpop.f32.mrf.mxu0
        %484 = vdwg.mxu0
        %vm485 = vcmask 64512
        %486 = vst.msk [vmem:[%s292] sm:$0xff] %vm485, %v482
        %s487 = scalar_lea.vmem %s2, 32
        %v488 = vld [vmem:[%s487] sm:$0xff]
        %v489 = vld [vmem:[%s487 + $0x8] sm:$0xff]
        %v490 = vld [vmem:[%s487 + $0x10] sm:$0xff]
        %v491 = vld [vmem:[%s487 + $0x18] sm:$0xff]
        %s492 = scalar_lea.vmem %s3, 1
        %v493 = vld [vmem:[%s492] sm:$0x1]
        %v495 = vlaneseq
        %v496 = vshrl.u32 %v495, 7
        %v497 = vsub.s32 0, %v496
        %v498 = vrot.slane %v493, %v497
        %500 = vmatprep.subr.mxu0 0.0
        %501 = vmatpush1.msra.mxu0 0.0
        %502 = vmatprep.subr.mxu0 0.0
        %503 = vmatpush1.msra.mxu0 0.0
        %504 = vmatprep.subr.mxu0 0.0
        %505 = vmatpush1.msra.mxu0 0.0
        %506 = vmatprep.subr.mxu0 0.0
        %507 = vmatpush1.msra.mxu0 0.0
        %508 = vmatprep.subr.mxu0 0.0
        %509 = vmatpush1.msra.mxu0 0.0
        %510 = vmatprep.subr.mxu0 0.0
        %511 = vmatpush1.msra.mxu0 0.0
        %512 = vmatprep.subr.mxu0 0.0
        %513 = vmatpush1.msra.mxu0 0.0
        %514 = vmatprep.subr.mxu0 0.0
        %515 = vmatpush1.msra.mxu0 0.0
        %516 = vmatprep.subr.mxu0 0.0
        %517 = vmatpush1.msra.mxu0 0.0
        %518 = vmatprep.subr.mxu0 0.0
        %519 = vmatpush1.msra.mxu0 0.0
        %520 = vmatprep.subr.mxu0 0.0
        %521 = vmatpush1.msra.mxu0 0.0
        %522 = vmatprep.subr.mxu0 0.0
        %523 = vmatpush1.msra.mxu0 0.0
        %524 = vmatprep.subr.mxu0 0.0
        %525 = vmatpush1.msra.mxu0 %v491
        %526 = vmatprep.subr.mxu0 0.0
        %527 = vmatpush1.msra.mxu0 %v490
        %528 = vmatprep.subr.mxu0 0.0
        %529 = vmatpush1.msra.mxu0 %v489
        %530 = vmatprep.subr.mxu0 0.0
        %531 = vmatpush1.msra.mxu0 %v488
        %532 = vmatprep.subr.mxu0 0.0
        %533 = vmatpush2.msra.mxu0 0.0
        %534 = vmatprep.subr.mxu0 0.0
        %535 = vmatpush2.msra.mxu0 0.0
        %536 = vmatprep.subr.mxu0 0.0
        %537 = vmatpush2.msra.mxu0 0.0
        %538 = vmatprep.subr.mxu0 0.0
        %539 = vmatpush2.msra.mxu0 0.0
        %540 = vmatprep.subr.mxu0 0.0
        %541 = vmatpush2.msra.mxu0 0.0
        %542 = vmatprep.subr.mxu0 0.0
        %543 = vmatpush2.msra.mxu0 0.0
        %544 = vmatprep.subr.mxu0 0.0
        %545 = vmatpush2.msra.mxu0 0.0
        %546 = vmatprep.subr.mxu0 0.0
        %547 = vmatpush2.msra.mxu0 0.0
        %548 = vmatprep.subr.mxu0 0.0
        %549 = vmatpush2.msra.mxu0 0.0
        %550 = vmatprep.subr.mxu0 0.0
        %551 = vmatpush2.msra.mxu0 0.0
        %552 = vmatprep.subr.mxu0 0.0
        %553 = vmatpush2.msra.mxu0 0.0
        %554 = vmatprep.subr.mxu0 0.0
        %555 = vmatpush2.msra.mxu0 0.0
        %556 = vmatprep.subr.mxu0 0.0
        %557 = vmatpush2.msra.mxu0 0.0
        %558 = vmatprep.subr.mxu0 0.0
        %559 = vmatpush2.msra.mxu0 0.0
        %560 = vmatprep.subr.mxu0 0.0
        %561 = vmatpush2.msra.mxu0 0.0
        %562 = vmatprep.subr.mxu0 0.0
        %563 = vmatpush2.msra.mxu0 0.0
        %564 = vmatprep.mubr.f32.mxu0 0.0
        %565 = vmatmul.mubr.f32.gmra.mxu0 %v334
        %v566 = vpop.f32.mrf.mxu0
        %v567 = vadd.f32 %v498, %v566
        %v568 = vpop.f32.mrf.mxu0
        %569 = vdwg.mxu0
        %s570 = scalar_lea.vmem %s315, 8
        %v571 = vld [vmem:[%s570] sm:$0xff]
        %573 = vset.pattern.permute.xlu0 0
        %574 = vperm.xlu0 %573, %v571
        %v575 = vpop.permute.xlu0 %574
        %v578 = vsel %vm332, %v567, 0
        %580 = vmatprep.subr.mxu0 0.0
        %581 = vmatpush1.msra.mxu0 0.0
        %582 = vmatprep.subr.mxu0 0.0
        %583 = vmatpush1.msra.mxu0 0.0
        %584 = vmatprep.subr.mxu0 0.0
        %585 = vmatpush1.msra.mxu0 0.0
        %586 = vmatprep.subr.mxu0 0.0
        %587 = vmatpush1.msra.mxu0 0.0
        %588 = vmatprep.subr.mxu0 0.0
        %589 = vmatpush1.msra.mxu0 0.0
        %590 = vmatprep.subr.mxu0 0.0
        %591 = vmatpush1.msra.mxu0 0.0
        %592 = vmatprep.subr.mxu0 0.0
        %593 = vmatpush1.msra.mxu0 0.0
        %594 = vmatprep.subr.mxu0 0.0
        %595 = vmatpush1.msra.mxu0 0.0
        %596 = vmatprep.subr.mxu0 0.0
        %597 = vmatpush1.msra.mxu0 0.0
        %598 = vmatprep.subr.mxu0 0.0
        %599 = vmatpush1.msra.mxu0 0.0
        %600 = vmatprep.subr.mxu0 0.0
        %601 = vmatpush1.msra.mxu0 0.0
        %602 = vmatprep.subr.mxu0 0.0
        %603 = vmatpush1.msra.mxu0 0.0
        %604 = vmatprep.subr.mxu0 0.0
        %605 = vmatpush1.msra.mxu0 %v320
        %606 = vmatprep.subr.mxu0 0.0
        %607 = vmatpush1.msra.mxu0 %v319
        %608 = vmatprep.subr.mxu0 0.0
        %609 = vmatpush1.msra.mxu0 %v318
        %610 = vmatprep.subr.mxu0 0.0
        %611 = vmatpush1.msra.mxu0 %v317
        %612 = vmatprep.subr.mxu0 0.0
        %613 = vmatpush2.msra.mxu0 0.0
        %614 = vmatprep.subr.mxu0 0.0
        %615 = vmatpush2.msra.mxu0 0.0
        %616 = vmatprep.subr.mxu0 0.0
        %617 = vmatpush2.msra.mxu0 0.0
        %618 = vmatprep.subr.mxu0 0.0
        %619 = vmatpush2.msra.mxu0 0.0
        %620 = vmatprep.subr.mxu0 0.0
        %621 = vmatpush2.msra.mxu0 0.0
        %622 = vmatprep.subr.mxu0 0.0
        %623 = vmatpush2.msra.mxu0 0.0
        %624 = vmatprep.subr.mxu0 0.0
        %625 = vmatpush2.msra.mxu0 0.0
        %626 = vmatprep.subr.mxu0 0.0
        %627 = vmatpush2.msra.mxu0 0.0
        %628 = vmatprep.subr.mxu0 0.0
        %629 = vmatpush2.msra.mxu0 0.0
        %630 = vmatprep.subr.mxu0 0.0
        %631 = vmatpush2.msra.mxu0 0.0
        %632 = vmatprep.subr.mxu0 0.0
        %633 = vmatpush2.msra.mxu0 0.0
        %634 = vmatprep.subr.mxu0 0.0
        %635 = vmatpush2.msra.mxu0 0.0
        %636 = vmatprep.subr.mxu0 0.0
        %637 = vmatpush2.msra.mxu0 0.0
        %638 = vmatprep.subr.mxu0 0.0
        %639 = vmatpush2.msra.mxu0 0.0
        %640 = vmatprep.subr.mxu0 0.0
        %641 = vmatpush2.msra.mxu0 0.0
        %642 = vmatprep.subr.mxu0 0.0
        %643 = vmatpush2.msra.mxu0 0.0
        %644 = vmatprep.mubr.f32.mxu0 0.0
        %645 = vmatmul.mubr.f32.gmra.mxu0 %v578
        %v646 = vpop.f32.mrf.mxu0
        %v647 = vadd.f32 %v575, %v646
        %v648 = vpop.f32.mrf.mxu0
        %649 = vdwg.mxu0
        %s650 = scalar_lea.vmem %s292, 8 [#allocation2]
        %651 = vst.msk [vmem:[%s650] sm:$0xff] %vm485, %v647
        %s652 = scalar_lea.vmem %s2, 64
        %v653 = vld [vmem:[%s652] sm:$0xff]
        %v654 = vld [vmem:[%s652 + $0x8] sm:$0xff]
        %v655 = vld [vmem:[%s652 + $0x10] sm:$0xff]
        %v656 = vld [vmem:[%s652 + $0x18] sm:$0xff]
        %s657 = scalar_lea.vmem %s3, 2
        %v658 = vld [vmem:[%s657] sm:$0x1]
        %v660 = vlaneseq
        %v661 = vshrl.u32 %v660, 7
        %v662 = vsub.s32 0, %v661
        %v663 = vrot.slane %v658, %v662
        %665 = vmatprep.subr.mxu0 0.0
        %666 = vmatpush1.msra.mxu0 0.0
        %667 = vmatprep.subr.mxu0 0.0
        %668 = vmatpush1.msra.mxu0 0.0
        %669 = vmatprep.subr.mxu0 0.0
        %670 = vmatpush1.msra.mxu0 0.0
        %671 = vmatprep.subr.mxu0 0.0
        %672 = vmatpush1.msra.mxu0 0.0
        %673 = vmatprep.subr.mxu0 0.0
        %674 = vmatpush1.msra.mxu0 0.0
        %675 = vmatprep.subr.mxu0 0.0
        %676 = vmatpush1.msra.mxu0 0.0
        %677 = vmatprep.subr.mxu0 0.0
        %678 = vmatpush1.msra.mxu0 0.0
        %679 = vmatprep.subr.mxu0 0.0
        %680 = vmatpush1.msra.mxu0 0.0
        %681 = vmatprep.subr.mxu0 0.0
        %682 = vmatpush1.msra.mxu0 0.0
        %683 = vmatprep.subr.mxu0 0.0
        %684 = vmatpush1.msra.mxu0 0.0
        %685 = vmatprep.subr.mxu0 0.0
        %686 = vmatpush1.msra.mxu0 0.0
        %687 = vmatprep.subr.mxu0 0.0
        %688 = vmatpush1.msra.mxu0 0.0
        %689 = vmatprep.subr.mxu0 0.0
        %690 = vmatpush1.msra.mxu0 %v656
        %691 = vmatprep.subr.mxu0 0.0
        %692 = vmatpush1.msra.mxu0 %v655
        %693 = vmatprep.subr.mxu0 0.0
        %694 = vmatpush1.msra.mxu0 %v654
        %695 = vmatprep.subr.mxu0 0.0
        %696 = vmatpush1.msra.mxu0 %v653
        %697 = vmatprep.subr.mxu0 0.0
        %698 = vmatpush2.msra.mxu0 0.0
        %699 = vmatprep.subr.mxu0 0.0
        %700 = vmatpush2.msra.mxu0 0.0
        %701 = vmatprep.subr.mxu0 0.0
        %702 = vmatpush2.msra.mxu0 0.0
        %703 = vmatprep.subr.mxu0 0.0
        %704 = vmatpush2.msra.mxu0 0.0
        %705 = vmatprep.subr.mxu0 0.0
        %706 = vmatpush2.msra.mxu0 0.0
        %707 = vmatprep.subr.mxu0 0.0
        %708 = vmatpush2.msra.mxu0 0.0
        %709 = vmatprep.subr.mxu0 0.0
        %710 = vmatpush2.msra.mxu0 0.0
        %711 = vmatprep.subr.mxu0 0.0
        %712 = vmatpush2.msra.mxu0 0.0
        %713 = vmatprep.subr.mxu0 0.0
        %714 = vmatpush2.msra.mxu0 0.0
        %715 = vmatprep.subr.mxu0 0.0
        %716 = vmatpush2.msra.mxu0 0.0
        %717 = vmatprep.subr.mxu0 0.0
        %718 = vmatpush2.msra.mxu0 0.0
        %719 = vmatprep.subr.mxu0 0.0
        %720 = vmatpush2.msra.mxu0 0.0
        %721 = vmatprep.subr.mxu0 0.0
        %722 = vmatpush2.msra.mxu0 0.0
        %723 = vmatprep.subr.mxu0 0.0
        %724 = vmatpush2.msra.mxu0 0.0
        %725 = vmatprep.subr.mxu0 0.0
        %726 = vmatpush2.msra.mxu0 0.0
        %727 = vmatprep.subr.mxu0 0.0
        %728 = vmatpush2.msra.mxu0 0.0
        %729 = vmatprep.mubr.f32.mxu0 0.0
        %730 = vmatmul.mubr.f32.gmra.mxu0 %v334
        %v731 = vpop.f32.mrf.mxu0
        %v732 = vadd.f32 %v663, %v731
        %v733 = vpop.f32.mrf.mxu0
        %734 = vdwg.mxu0
        %s735 = scalar_lea.vmem %s315, 16
        %v736 = vld [vmem:[%s735] sm:$0xff]
        %738 = vset.pattern.permute.xlu0 0
        %739 = vperm.xlu0 %738, %v736
        %v740 = vpop.permute.xlu0 %739
        %v743 = vsel %vm332, %v732, 0
        %745 = vmatprep.subr.mxu0 0.0
        %746 = vmatpush1.msra.mxu0 0.0
        %747 = vmatprep.subr.mxu0 0.0
        %748 = vmatpush1.msra.mxu0 0.0
        %749 = vmatprep.subr.mxu0 0.0
        %750 = vmatpush1.msra.mxu0 0.0
        %751 = vmatprep.subr.mxu0 0.0
        %752 = vmatpush1.msra.mxu0 0.0
        %753 = vmatprep.subr.mxu0 0.0
        %754 = vmatpush1.msra.mxu0 0.0
        %755 = vmatprep.subr.mxu0 0.0
        %756 = vmatpush1.msra.mxu0 0.0
        %757 = vmatprep.subr.mxu0 0.0
        %758 = vmatpush1.msra.mxu0 0.0
        %759 = vmatprep.subr.mxu0 0.0
        %760 = vmatpush1.msra.mxu0 0.0
        %761 = vmatprep.subr.mxu0 0.0
        %762 = vmatpush1.msra.mxu0 0.0
        %763 = vmatprep.subr.mxu0 0.0
        %764 = vmatpush1.msra.mxu0 0.0
        %765 = vmatprep.subr.mxu0 0.0
        %766 = vmatpush1.msra.mxu0 0.0
        %767 = vmatprep.subr.mxu0 0.0
        %768 = vmatpush1.msra.mxu0 0.0
        %769 = vmatprep.subr.mxu0 0.0
        %770 = vmatpush1.msra.mxu0 %v320
        %771 = vmatprep.subr.mxu0 0.0
        %772 = vmatpush1.msra.mxu0 %v319
        %773 = vmatprep.subr.mxu0 0.0
        %774 = vmatpush1.msra.mxu0 %v318
        %775 = vmatprep.subr.mxu0 0.0
        %776 = vmatpush1.msra.mxu0 %v317
        %777 = vmatprep.subr.mxu0 0.0
        %778 = vmatpush2.msra.mxu0 0.0
        %779 = vmatprep.subr.mxu0 0.0
        %780 = vmatpush2.msra.mxu0 0.0
        %781 = vmatprep.subr.mxu0 0.0
        %782 = vmatpush2.msra.mxu0 0.0
        %783 = vmatprep.subr.mxu0 0.0
        %784 = vmatpush2.msra.mxu0 0.0
        %785 = vmatprep.subr.mxu0 0.0
        %786 = vmatpush2.msra.mxu0 0.0
        %787 = vmatprep.subr.mxu0 0.0
        %788 = vmatpush2.msra.mxu0 0.0
        %789 = vmatprep.subr.mxu0 0.0
        %790 = vmatpush2.msra.mxu0 0.0
        %791 = vmatprep.subr.mxu0 0.0
        %792 = vmatpush2.msra.mxu0 0.0
        %793 = vmatprep.subr.mxu0 0.0
        %794 = vmatpush2.msra.mxu0 0.0
        %795 = vmatprep.subr.mxu0 0.0
        %796 = vmatpush2.msra.mxu0 0.0
        %797 = vmatprep.subr.mxu0 0.0
        %798 = vmatpush2.msra.mxu0 0.0
        %799 = vmatprep.subr.mxu0 0.0
        %800 = vmatpush2.msra.mxu0 0.0
        %801 = vmatprep.subr.mxu0 0.0
        %802 = vmatpush2.msra.mxu0 0.0
        %803 = vmatprep.subr.mxu0 0.0
        %804 = vmatpush2.msra.mxu0 0.0
        %805 = vmatprep.subr.mxu0 0.0
        %806 = vmatpush2.msra.mxu0 0.0
        %807 = vmatprep.subr.mxu0 0.0
        %808 = vmatpush2.msra.mxu0 0.0
        %809 = vmatprep.mubr.f32.mxu0 0.0
        %810 = vmatmul.mubr.f32.gmra.mxu0 %v743
        %v811 = vpop.f32.mrf.mxu0
        %v812 = vadd.f32 %v740, %v811
        %v813 = vpop.f32.mrf.mxu0
        %814 = vdwg.mxu0
        %s815 = scalar_lea.vmem %s292, 16 [#allocation2]
        %816 = vst.msk [vmem:[%s815] sm:$0xff] %vm485, %v812
        %s817 = scalar_lea.vmem %s2, 96
        %v818 = vld [vmem:[%s817] sm:$0xff]
        %v819 = vld [vmem:[%s817 + $0x8] sm:$0xff]
        %v820 = vld [vmem:[%s817 + $0x10] sm:$0xff]
        %v821 = vld [vmem:[%s817 + $0x18] sm:$0xff]
        %s822 = scalar_lea.vmem %s3, 3
        %v823 = vld [vmem:[%s822] sm:$0x1]
        %v825 = vlaneseq
        %v826 = vshrl.u32 %v825, 7
        %v827 = vsub.s32 0, %v826
        %v828 = vrot.slane %v823, %v827
        %830 = vmatprep.subr.mxu0 0.0
        %831 = vmatpush1.msra.mxu0 0.0
        %832 = vmatprep.subr.mxu0 0.0
        %833 = vmatpush1.msra.mxu0 0.0
        %834 = vmatprep.subr.mxu0 0.0
        %835 = vmatpush1.msra.mxu0 0.0
        %836 = vmatprep.subr.mxu0 0.0
        %837 = vmatpush1.msra.mxu0 0.0
        %838 = vmatprep.subr.mxu0 0.0
        %839 = vmatpush1.msra.mxu0 0.0
        %840 = vmatprep.subr.mxu0 0.0
        %841 = vmatpush1.msra.mxu0 0.0
        %842 = vmatprep.subr.mxu0 0.0
        %843 = vmatpush1.msra.mxu0 0.0
        %844 = vmatprep.subr.mxu0 0.0
        %845 = vmatpush1.msra.mxu0 0.0
        %846 = vmatprep.subr.mxu0 0.0
        %847 = vmatpush1.msra.mxu0 0.0
        %848 = vmatprep.subr.mxu0 0.0
        %849 = vmatpush1.msra.mxu0 0.0
        %850 = vmatprep.subr.mxu0 0.0
        %851 = vmatpush1.msra.mxu0 0.0
        %852 = vmatprep.subr.mxu0 0.0
        %853 = vmatpush1.msra.mxu0 0.0
        %854 = vmatprep.subr.mxu0 0.0
        %855 = vmatpush1.msra.mxu0 %v821
        %856 = vmatprep.subr.mxu0 0.0
        %857 = vmatpush1.msra.mxu0 %v820
        %858 = vmatprep.subr.mxu0 0.0
        %859 = vmatpush1.msra.mxu0 %v819
        %860 = vmatprep.subr.mxu0 0.0
        %861 = vmatpush1.msra.mxu0 %v818
        %862 = vmatprep.subr.mxu0 0.0
        %863 = vmatpush2.msra.mxu0 0.0
        %864 = vmatprep.subr.mxu0 0.0
        %865 = vmatpush2.msra.mxu0 0.0
        %866 = vmatprep.subr.mxu0 0.0
        %867 = vmatpush2.msra.mxu0 0.0
        %868 = vmatprep.subr.mxu0 0.0
        %869 = vmatpush2.msra.mxu0 0.0
        %870 = vmatprep.subr.mxu0 0.0
        %871 = vmatpush2.msra.mxu0 0.0
        %872 = vmatprep.subr.mxu0 0.0
        %873 = vmatpush2.msra.mxu0 0.0
        %874 = vmatprep.subr.mxu0 0.0
        %875 = vmatpush2.msra.mxu0 0.0
        %876 = vmatprep.subr.mxu0 0.0
        %877 = vmatpush2.msra.mxu0 0.0
        %878 = vmatprep.subr.mxu0 0.0
        %879 = vmatpush2.msra.mxu0 0.0
        %880 = vmatprep.subr.mxu0 0.0
        %881 = vmatpush2.msra.mxu0 0.0
        %882 = vmatprep.subr.mxu0 0.0
        %883 = vmatpush2.msra.mxu0 0.0
        %884 = vmatprep.subr.mxu0 0.0
        %885 = vmatpush2.msra.mxu0 0.0
        %886 = vmatprep.subr.mxu0 0.0
        %887 = vmatpush2.msra.mxu0 0.0
        %888 = vmatprep.subr.mxu0 0.0
        %889 = vmatpush2.msra.mxu0 0.0
        %890 = vmatprep.subr.mxu0 0.0
        %891 = vmatpush2.msra.mxu0 0.0
        %892 = vmatprep.subr.mxu0 0.0
        %893 = vmatpush2.msra.mxu0 0.0
        %894 = vmatprep.mubr.f32.mxu0 0.0
        %895 = vmatmul.mubr.f32.gmra.mxu0 %v334
        %v896 = vpop.f32.mrf.mxu0
        %v897 = vadd.f32 %v828, %v896
        %v898 = vpop.f32.mrf.mxu0
        %899 = vdwg.mxu0
        %s900 = scalar_lea.vmem %s315, 24
        %v901 = vld [vmem:[%s900] sm:$0xff]
        %903 = vset.pattern.permute.xlu0 0
        %904 = vperm.xlu0 %903, %v901
        %v905 = vpop.permute.xlu0 %904
        %v908 = vsel %vm332, %v897, 0
        %910 = vmatprep.subr.mxu0 0.0
        %911 = vmatpush1.msra.mxu0 0.0
        %912 = vmatprep.subr.mxu0 0.0
        %913 = vmatpush1.msra.mxu0 0.0
        %914 = vmatprep.subr.mxu0 0.0
        %915 = vmatpush1.msra.mxu0 0.0
        %916 = vmatprep.subr.mxu0 0.0
        %917 = vmatpush1.msra.mxu0 0.0
        %918 = vmatprep.subr.mxu0 0.0
        %919 = vmatpush1.msra.mxu0 0.0
        %920 = vmatprep.subr.mxu0 0.0
        %921 = vmatpush1.msra.mxu0 0.0
        %922 = vmatprep.subr.mxu0 0.0
        %923 = vmatpush1.msra.mxu0 0.0
        %924 = vmatprep.subr.mxu0 0.0
        %925 = vmatpush1.msra.mxu0 0.0
        %926 = vmatprep.subr.mxu0 0.0
        %927 = vmatpush1.msra.mxu0 0.0
        %928 = vmatprep.subr.mxu0 0.0
        %929 = vmatpush1.msra.mxu0 0.0
        %930 = vmatprep.subr.mxu0 0.0
        %931 = vmatpush1.msra.mxu0 0.0
        %932 = vmatprep.subr.mxu0 0.0
        %933 = vmatpush1.msra.mxu0 0.0
        %934 = vmatprep.subr.mxu0 0.0
        %935 = vmatpush1.msra.mxu0 %v320
        %936 = vmatprep.subr.mxu0 0.0
        %937 = vmatpush1.msra.mxu0 %v319
        %938 = vmatprep.subr.mxu0 0.0
        %939 = vmatpush1.msra.mxu0 %v318
        %940 = vmatprep.subr.mxu0 0.0
        %941 = vmatpush1.msra.mxu0 %v317
        %942 = vmatprep.subr.mxu0 0.0
        %943 = vmatpush2.msra.mxu0 0.0
        %944 = vmatprep.subr.mxu0 0.0
        %945 = vmatpush2.msra.mxu0 0.0
        %946 = vmatprep.subr.mxu0 0.0
        %947 = vmatpush2.msra.mxu0 0.0
        %948 = vmatprep.subr.mxu0 0.0
        %949 = vmatpush2.msra.mxu0 0.0
        %950 = vmatprep.subr.mxu0 0.0
        %951 = vmatpush2.msra.mxu0 0.0
        %952 = vmatprep.subr.mxu0 0.0
        %953 = vmatpush2.msra.mxu0 0.0
        %954 = vmatprep.subr.mxu0 0.0
        %955 = vmatpush2.msra.mxu0 0.0
        %956 = vmatprep.subr.mxu0 0.0
        %957 = vmatpush2.msra.mxu0 0.0
        %958 = vmatprep.subr.mxu0 0.0
        %959 = vmatpush2.msra.mxu0 0.0
        %960 = vmatprep.subr.mxu0 0.0
        %961 = vmatpush2.msra.mxu0 0.0
        %962 = vmatprep.subr.mxu0 0.0
        %963 = vmatpush2.msra.mxu0 0.0
        %964 = vmatprep.subr.mxu0 0.0
        %965 = vmatpush2.msra.mxu0 0.0
        %966 = vmatprep.subr.mxu0 0.0
        %967 = vmatpush2.msra.mxu0 0.0
        %968 = vmatprep.subr.mxu0 0.0
        %969 = vmatpush2.msra.mxu0 0.0
        %970 = vmatprep.subr.mxu0 0.0
        %971 = vmatpush2.msra.mxu0 0.0
        %972 = vmatprep.subr.mxu0 0.0
        %973 = vmatpush2.msra.mxu0 0.0
        %974 = vmatprep.mubr.f32.mxu0 0.0
        %975 = vmatmul.mubr.f32.gmra.mxu0 %v908
        %v976 = vpop.f32.mrf.mxu0
        %v977 = vadd.f32 %v905, %v976
        %v978 = vpop.f32.mrf.mxu0
        %979 = vdwg.mxu0
        %s980 = scalar_lea.vmem %s292, 24 [#allocation2]
        %981 = vst.msk [vmem:[%s980] sm:$0xff] %vm485, %v977
        %s982 = sand.u32 %s176, 1
        %s983 = scalar_lea.sflag [#allocation3], %s982
        %s984 = sand.u32 %s176, 1
        %s985 = smul.addr %s984, 32
        %s986 = scalar_lea.vmem [#allocation2], %s985
        // Predicated region
        $region41: #{tpu_custom_call.1} parent=39 // pred_check
          %p987 = pneg %p186
        $region42: #{tpu_custom_call.1} parent=39 // pred_check_branch
          %989 = sbr.rel (%p987) target = $region44
        $region43: #{tpu_custom_call.1} parent=39 // pred_region
          %s991 = ssub.s32 512, 512
          %992 = vsyncadd %s983, %s991
          %s993 = sadd.s32 %s26, %s25
          %s994 = smul.addr %s24, 4
          %s995 = sadd.s32 %s993, %s994
          %s996 = smul.addr %s995, 128
          %s997 = scalar_lea.hbm %s5, %s996
          %s998 = sshll.u32 %s986, 4
          %s999 = int_to_ptr.vmem [resolvable:$true] %s998
          %1004 = dma.vmem_to_hbm [thread:$0]  %s999, 512, %s997, %s983, 128, 128, 8
        $region44: #{tpu_custom_call.1} parent=39 // pred_fallthru
          _
      $region40: #{tpu_custom_call.1} parent=5 // pred_fallthru
        _
      %p1005 = scmp.le.s32.totalorder 2, %s14
      // Predicated region
      $region45: #{tpu_custom_call.1} parent=5 // pred_check
        %p1006 = pneg %p1005
      $region46: #{tpu_custom_call.1} parent=5 // pred_check_branch
        %1008 = sbr.rel (%p1006) target = $region48
      $region47: #{tpu_custom_call.1} parent=5 // pred_region
        %s1009 = ssub.s32 %s14, 2
        // Predicated region
        $region49: #{tpu_custom_call.1} parent=47 // pred_check
          %p1010 = pneg %p192
        $region50: #{tpu_custom_call.1} parent=47 // pred_check_branch
          %1012 = sbr.rel (%p1010) target = $region52
        $region51: #{tpu_custom_call.1} parent=47 // pred_region
          %s1013 = sand.u32 %s177, 1
          %s1014 = scalar_lea.sflag [#allocation3], %s1013
          %s1015 = sand.u32 %s177, 1
          %s1016 = smul.addr %s1015, 32
          %s1017 = scalar_lea.vmem [#allocation2], %s1016
          %1018 = dma.done %s1014, 512
        $region52: #{tpu_custom_call.1} parent=47 // pred_fallthru
          _
      $region48: #{tpu_custom_call.1} parent=5 // pred_fallthru
        _
    $region6: #{tpu_custom_call.1} parent=1 // loop_footer
      %s18 = sadd.s32 1, %s14
    $region7: #{tpu_custom_call.1} parent=1 // loop_footer_branch
      %13 = sbr.rel target = $region3
    $region8: #{tpu_custom_call.1} parent=1 // loop_exit
      _
    %1019 = vsyncpa [#allocation3], 1
    %s1020 = scalar_lea.sflag [#allocation3], 1
    %1021 = vsyncpa %s1020, 1

// kernel: tpu_custom_call.1
$region0: #{tpu_custom_call.1}
  #allocation0 [shape = 'u32[]', space=smem, size = 0x4, offset = 0x4, fixed_abs, tag = 'smem constant byte address 0x4 - core index']
  #allocation1 [shape = 'u32[144,128]{1,0:T(1,128)}', space=vmem, size = 0x12000, scoped, tag = 'internal scratch']
  %s0 = inlined_call_operand.vmem [shape: f32[2,8,32], index: 0, kind: input, shape index: {}]
  %s1 = inlined_call_operand.vmem [shape: f32[2,32,8], index: 1, kind: input, shape index: {}]
  %s2 = inlined_call_operand.vmem [shape: f32[4,32,32], index: 2, kind: input, shape index: {}]
  %s3 = inlined_call_operand.vmem [shape: f32[4,1,32], index: 3, kind: input, shape index: {}]
  %s4 = inlined_call_operand.vmem [shape: f32[2,4,8,1], index: 4, kind: input, shape index: {}]
  %s5 = inlined_call_operand.hbm [shape: f32[2,4,8,8], index: 5, kind: output, shape index: {}]
  %s6 = sld [smem:[#allocation0]]
  $region53: #{tpu_custom_call.1} parent=0
    _
  %s8 = ssub.s32 1, %s6
  %s9 = scalar_select 0, %s8, %s6
  $region1: #{tpu_custom_call.1} parent=0
    #allocation2 [shape = 'u8[32768]{0}', space=vmem, size = 0x8000, scoped, tag = 'output window, operand 0']
    #allocation3 [shape = 's32[2]{0}', space=sflag, size = 0x8, scoped, tag = 'scoped memory for tpu_custom_call.1']
    %10 = vsyncpa [#allocation3], 0
    %s11 = scalar_lea.sflag [#allocation3], 1
    %12 = vsyncpa %s11, 0
    loop: start=0, step=1, limit=4
    $region2: #{tpu_custom_call.1} parent=1 // loop_pre_header
      _
    $region3: #{tpu_custom_call.1} parent=1 // loop_header
      %s14 = sphi 0, %s18
      %p15 = scmp.ge.s32.totalorder %s14, 4
      %s21 = sphi 0, %s40
      %s22 = sphi 0, %s36
      %s23 = sphi 0, %s32
      %s24 = sphi 0, %s21
      %s25 = sphi 0, %s22
      %s26 = sphi 0, %s23
      %s27 = sphi 0, %s24
      %s28 = sphi 0, %s25
      %s29 = sphi 0, %s26
      %s45 = sphi 0, %s47
      %s48 = sphi 0, %s45
      %s49 = sphi 0, %s48
      %s65 = sphi 0, %s49
      %s73 = sphi 0, %s75
      %s76 = sphi 0, %s73
      %s77 = sphi 0, %s76
      %s93 = sphi 0, %s77
      %s97 = sphi 0, %s97
      %s99 = sphi 0, %s97
      %s100 = sphi 0, %s99
      %s114 = sphi 0, %s100
      %s118 = sphi 0, %s118
      %s120 = sphi 0, %s118
      %s121 = sphi 0, %s120
      %s135 = sphi 0, %s121
      %s143 = sphi 0, %s145
      %s146 = sphi 0, %s143
      %s147 = sphi 0, %s146
      %s163 = sphi 0, %s147
      %s173 = sphi 0, %s175
      %s176 = sphi 0, %s173
      %s177 = sphi 0, %s176
      %s193 = sphi 0, %s177
    $region4: #{tpu_custom_call.1} parent=1 // loop_header_branch
      %17 = sbr.rel (%p15) target = $region8
    $region5: #{tpu_custom_call.1} parent=1 // loop_body
      %s19 = ssub.s32 %s14, 1
      %s20 = ssub.s32 %s14, 2
      %s30 = sadd.s32 1, %s23
      %p31 = scmp.ge.s32.totalorder %s30, 1
      %s32 = scalar_select %p31, 0, %s30
      %s33 = sadd.s32 1, %s22
      %s34 = scalar_select %p31, %s33, %s22
      %p35 = scmp.ge.s32.totalorder %s34, 1
      %s36 = scalar_select %p35, 0, %s34
      %s37 = sadd.s32 1, %s21
      %s38 = scalar_select %p35, %s37, %s21
      %p39 = scmp.ge.s32.totalorder %s38, 2
      %s40 = scalar_select %p39, 0, %s38
      %s41 = ssub.s32 %s21, %s40
      %s42 = ssub.s32 %s22, %s36
      %s43 = sor.u32 %s41, %s42
      %p44 = scmp.eq.s32.totalorder %s43, 0
      %s46 = sadd.s32 %s45, 1
      %s47 = scalar_select %p44, %s45, %s46
      %p50 = pneg %p44
      %p51 = scmp.eq.s32.totalorder %s14, 1
      %p52 = por %p50, %p51
      %p53 = scmp.ne.s32.totalorder %s45, %s48
      %p54 = scmp.eq.s32.totalorder %s14, 0
      %p55 = por %p53, %p54
      %p56 = scmp.ne.s32.totalorder %s45, %s48
      %p57 = scmp.eq.s32.totalorder %s19, 1
      %p58 = por %p56, %p57
      %p59 = scmp.ne.s32.totalorder %s48, %s49
      %p60 = scmp.eq.s32.totalorder %s19, 0
      %p61 = por %p59, %p60
      %p62 = scmp.ne.s32.totalorder %s48, %s49
      %p63 = scmp.eq.s32.totalorder %s20, 1
      %p64 = por %p62, %p63
      %p66 = scmp.ne.s32.totalorder %s49, %s65
      %p67 = scmp.eq.s32.totalorder %s20, 0
      %p68 = por %p66, %p67
      %s69 = ssub.s32 %s21, %s40
      %s70 = ssub.s32 %s23, %s32
      %s71 = sor.u32 %s69, %s70
      %p72 = scmp.eq.s32.totalorder %s71, 0
      %s74 = sadd.s32 %s73, 1
      %s75 = scalar_select %p72, %s73, %s74
      %p78 = pneg %p72
      %p79 = scmp.eq.s32.totalorder %s14, 1
      %p80 = por %p78, %p79
      %p81 = scmp.ne.s32.totalorder %s73, %s76
      %p82 = scmp.eq.s32.totalorder %s14, 0
      %p83 = por %p81, %p82
      %p84 = scmp.ne.s32.totalorder %s73, %s76
      %p85 = scmp.eq.s32.totalorder %s19, 1
      %p86 = por %p84, %p85
      %p87 = scmp.ne.s32.totalorder %s76, %s77
      %p88 = scmp.eq.s32.totalorder %s19, 0
      %p89 = por %p87, %p88
      %p90 = scmp.ne.s32.totalorder %s76, %s77
      %p91 = scmp.eq.s32.totalorder %s20, 1
      %p92 = por %p90, %p91
      %p94 = scmp.ne.s32.totalorder %s77, %s93
      %p95 = scmp.eq.s32.totalorder %s20, 0
      %p96 = por %p94, %p95
      %s98 = sadd.s32 %s97, 1
      %p101 = scmp.eq.s32.totalorder %s14, 1
      %p102 = scmp.ne.s32.totalorder %s97, %s99
      %p103 = scmp.eq.s32.totalorder %s14, 0
      %p104 = por %p102, %p103
      %p105 = scmp.ne.s32.totalorder %s97, %s99
      %p106 = scmp.eq.s32.totalorder %s19, 1
      %p107 = por %p105, %p106
      %p108 = scmp.ne.s32.totalorder %s99, %s100
      %p109 = scmp.eq.s32.totalorder %s19, 0
      %p110 = por %p108, %p109
      %p111 = scmp.ne.s32.totalorder %s99, %s100
      %p112 = scmp.eq.s32.totalorder %s20, 1
      %p113 = por %p111, %p112
      %p115 = scmp.ne.s32.totalorder %s100, %s114
      %p116 = scmp.eq.s32.totalorder %s20, 0
      %p117 = por %p115, %p116
      %s119 = sadd.s32 %s118, 1
      %p122 = scmp.eq.s32.totalorder %s14, 1
      %p123 = scmp.ne.s32.totalorder %s118, %s120
      %p124 = scmp.eq.s32.totalorder %s14, 0
      %p125 = por %p123, %p124
      %p126 = scmp.ne.s32.totalorder %s118, %s120
      %p127 = scmp.eq.s32.totalorder %s19, 1
      %p128 = por %p126, %p127
      %p129 = scmp.ne.s32.totalorder %s120, %s121
      %p130 = scmp.eq.s32.totalorder %s19, 0
      %p131 = por %p129, %p130
      %p132 = scmp.ne.s32.totalorder %s120, %s121
      %p133 = scmp.eq.s32.totalorder %s20, 1
      %p134 = por %p132, %p133
      %p136 = scmp.ne.s32.totalorder %s121, %s135
      %p137 = scmp.eq.s32.totalorder %s20, 0
      %p138 = por %p136, %p137
      %s139 = ssub.s32 %s21, %s40
      %s140 = ssub.s32 %s22, %s36
      %s141 = sor.u32 %s139, %s140
      %p142 = scmp.eq.s32.totalorder %s141, 0
      %s144 = sadd.s32 %s143, 1
      %s145 = scalar_select %p142, %s143, %s144
      %p148 = pneg %p142
      %p149 = scmp.eq.s32.totalorder %s14, 1
      %p150 = por %p148, %p149
      %p151 = scmp.ne.s32.totalorder %s143, %s146
      %p152 = scmp.eq.s32.totalorder %s14, 0
      %p153 = por %p151, %p152
      %p154 = scmp.ne.s32.totalorder %s143, %s146
      %p155 = scmp.eq.s32.totalorder %s19, 1
      %p156 = por %p154, %p155
      %p157 = scmp.ne.s32.totalorder %s146, %s147
      %p158 = scmp.eq.s32.totalorder %s19, 0
      %p159 = por %p157, %p158
      %p160 = scmp.ne.s32.totalorder %s146, %s147
      %p161 = scmp.eq.s32.totalorder %s20, 1
      %p162 = por %p160, %p161
      %p164 = scmp.ne.s32.totalorder %s147, %s163
      %p165 = scmp.eq.s32.totalorder %s20, 0
      %p166 = por %p164, %p165
      %s167 = ssub.s32 %s21, %s40
      %s168 = ssub.s32 %s22, %s36
      %s169 = sor.u32 %s167, %s168
      %s170 = ssub.s32 %s23, %s32
      %s171 = sor.u32 %s169, %s170
      %p172 = scmp.eq.s32.totalorder %s171, 0
      %s174 = sadd.s32 %s173, 1
      %s175 = scalar_select %p172, %s173, %s174
      %p178 = pneg %p172
      %p179 = scmp.eq.s32.totalorder %s14, 1
      %p180 = por %p178, %p179
      %p181 = scmp.ne.s32.totalorder %s173, %s176
      %p182 = scmp.eq.s32.totalorder %s14, 0
      %p183 = por %p181, %p182
      %p184 = scmp.ne.s32.totalorder %s173, %s176
      %p185 = scmp.eq.s32.totalorder %s19, 1
      %p186 = por %p184, %p185
      %p187 = scmp.ne.s32.totalorder %s176, %s177
      %p188 = scmp.eq.s32.totalorder %s19, 0
      %p189 = por %p187, %p188
      %p190 = scmp.ne.s32.totalorder %s176, %s177
      %p191 = scmp.eq.s32.totalorder %s20, 1
      %p192 = por %p190, %p191
      %p194 = scmp.ne.s32.totalorder %s177, %s193
      %p195 = scmp.eq.s32.totalorder %s20, 0
      %p196 = por %p194, %p195
      %p197 = scmp.le.s32.totalorder 1, %s14
      %p198 = scmp.lt.s32.totalorder %s14, 3
      %p199 = pnand %p197, %p198
      %p200 = pneg %p199
      // Predicated region
      $region9: #{tpu_custom_call.1} parent=5 // pred_check
        _
      $region10: #{tpu_custom_call.1} parent=5 // pred_check_branch
        %202 = sbr.rel (%p199) target = $region12
      $region11: #{tpu_custom_call.1} parent=5 // pred_region
        %s203 = ssub.s32 %s14, 1
        // Predicated region
        $region13: #{tpu_custom_call.1} parent=11 // pred_check
          %p204 = pneg %p110
        $region14: #{tpu_custom_call.1} parent=11 // pred_check_branch
          %206 = sbr.rel (%p204) target = $region16
        $region15: #{tpu_custom_call.1} parent=11 // pred_region
          _
        $region16: #{tpu_custom_call.1} parent=11 // pred_fallthru
          _
        // Predicated region
        $region17: #{tpu_custom_call.1} parent=11 // pred_check
          %p207 = pneg %p131
        $region18: #{tpu_custom_call.1} parent=11 // pred_check_branch
          %209 = sbr.rel (%p207) target = $region20
        $region19: #{tpu_custom_call.1} parent=11 // pred_region
          _
        $region20: #{tpu_custom_call.1} parent=11 // pred_fallthru
          _
      $region12: #{tpu_custom_call.1} parent=5 // pred_fallthru
        _
      %p210 = scmp.lt.s32.totalorder %s14, 2
      // Predicated region
      $region21: #{tpu_custom_call.1} parent=5 // pred_check
        %p211 = pneg %p210
      $region22: #{tpu_custom_call.1} parent=5 // pred_check_branch
        %213 = sbr.rel (%p211) target = $region24
      $region23: #{tpu_custom_call.1} parent=5 // pred_region
        // Predicated region
        $region25: #{tpu_custom_call.1} parent=23 // pred_check
          %p214 = pneg %p55
        $region26: #{tpu_custom_call.1} parent=23 // pred_check_branch
          %216 = sbr.rel (%p214) target = $region28
        $region27: #{tpu_custom_call.1} parent=23 // pred_region
          %p217 = scmp.lt.s32.totalorder %s21, 1
          %s218 = scalar_select %p217, %s21, 1
          %p219 = scmp.lt.s32.totalorder %s22, 0
          %s220 = scalar_select %p219, %s22, 0
          %s221 = sadd.s32 %s220, %s218
          %s222 = smul.addr %s221, 8
          %s223 = scalar_lea.vmem %s0, %s222
        $region28: #{tpu_custom_call.1} parent=23 // pred_fallthru
          _
        // Predicated region
        $region29: #{tpu_custom_call.1} parent=23 // pred_check
          %p224 = pneg %p83
        $region30: #{tpu_custom_call.1} parent=23 // pred_check_branch
          %226 = sbr.rel (%p224) target = $region32
        $region31: #{tpu_custom_call.1} parent=23 // pred_region
          %p227 = scmp.lt.s32.totalorder %s21, 1
          %s228 = scalar_select %p227, %s21, 1
          %p229 = scmp.lt.s32.totalorder %s23, 0
          %s230 = scalar_select %p229, %s23, 0
          %s231 = smul.addr %s228, 4
          %s232 = sadd.s32 %s230, %s231
          %s233 = smul.addr %s232, 8
          %s234 = scalar_lea.vmem %s1, %s233
        $region32: #{tpu_custom_call.1} parent=23 // pred_fallthru
          _
        // Predicated region
        $region33: #{tpu_custom_call.1} parent=23 // pred_check
          %p235 = pneg %p153
        $region34: #{tpu_custom_call.1} parent=23 // pred_check_branch
          %237 = sbr.rel (%p235) target = $region36
        $region35: #{tpu_custom_call.1} parent=23 // pred_region
          %p238 = scmp.lt.s32.totalorder %s21, 1
          %s239 = scalar_select %p238, %s21, 1
          %p240 = scmp.lt.s32.totalorder %s22, 0
          %s241 = scalar_select %p240, %s22, 0
          %s242 = smul.addr %s239, 4
          %s243 = sadd.s32 %s241, %s242
          %s244 = smul.addr %s243, 8
          %s245 = scalar_lea.vmem %s4, %s244
        $region36: #{tpu_custom_call.1} parent=23 // pred_fallthru
          _
      $region24: #{tpu_custom_call.1} parent=5 // pred_fallthru
        _
      %p246 = scmp.le.s32.totalorder 1, %s14
      %p247 = scmp.lt.s32.totalorder %s14, 3
      %p248 = pnand %p246, %p247
      %p249 = pneg %p248
      // Predicated region
      $region37: #{tpu_custom_call.1} parent=5 // pred_check
        _
      $region38: #{tpu_custom_call.1} parent=5 // pred_check_branch
        %251 = sbr.rel (%p248) target = $region40
      $region39: #{tpu_custom_call.1} parent=5 // pred_region
        %s252 = ssub.s32 %s14, 1
        %p253 = scmp.lt.s32.totalorder %s24, 1
        %s254 = scalar_select %p253, %s24, 1
        %p255 = scmp.lt.s32.totalorder %s25, 0
        %s256 = scalar_select %p255, %s25, 0
        %s257 = sadd.s32 %s256, %s254
        %s258 = smul.addr %s257, 8
        %s259 = scalar_lea.vmem %s0, %s258
        %p260 = pneg %p61
        %p261 = pneg %p58
        %p262 = scmp.lt.s32.totalorder %s24, 1
        %s263 = scalar_select %p262, %s24, 1
        %p264 = scmp.lt.s32.totalorder %s26, 0
        %s265 = scalar_select %p264, %s26, 0
        %s266 = smul.addr %s263, 4
        %s267 = sadd.s32 %s265, %s266
        %s268 = smul.addr %s267, 8
        %s269 = scalar_lea.vmem %s1, %s268
        %p270 = pneg %p89
        %p271 = pneg %p86
        %p272 = pneg %p110
        %p273 = pneg %p107
        %p274 = pneg %p131
        %p275 = pneg %p128
        %p276 = scmp.lt.s32.totalorder %s24, 1
        %s277 = scalar_select %p276, %s24, 1
        %p278 = scmp.lt.s32.totalorder %s25, 0
        %s279 = scalar_select %p278, %s25, 0
        %s280 = smul.addr %s277, 4
        %s281 = sadd.s32 %s279, %s280
        %s282 = smul.addr %s281, 8
        %s283 = scalar_lea.vmem %s4, %s282
        %p284 = pneg %p159
        %p285 = pneg %p156
        %p286 = pneg %p189
        %p287 = pneg %p186
        %s288 = sand.u32 %s176, 1
        %s289 = scalar_lea.sflag [#allocation3], %s288
        %s290 = sand.u32 %s176, 1
        %s291 = smul.addr %s290, 32
        %s292 = scalar_lea.vmem [#allocation2], %s291
        %p293 = scmp.lt.s32.totalorder %s24, 1
        %s294 = scalar_select %p293, %s24, 1
        %p295 = scmp.lt.s32.totalorder %s25, 0
        %s296 = scalar_select %p295, %s25, 0
        %s297 = sadd.s32 %s296, %s294
        %s298 = smul.addr %s297, 8
        %s299 = scalar_lea.vmem %s0, %s298
        %p300 = scmp.lt.s32.totalorder %s24, 1
        %s301 = scalar_select %p300, %s24, 1
        %p302 = scmp.lt.s32.totalorder %s26, 0
        %s303 = scalar_select %p302, %s26, 0
        %s304 = smul.addr %s301, 4
        %s305 = sadd.s32 %s303, %s304
        %s306 = smul.addr %s305, 8
        %s307 = scalar_lea.vmem %s1, %s306
        %p308 = scmp.lt.s32.totalorder %s24, 1
        %s309 = scalar_select %p308, %s24, 1
        %p310 = scmp.lt.s32.totalorder %s25, 0
        %s311 = scalar_select %p310, %s25, 0
        %s312 = smul.addr %s309, 4
        %s313 = sadd.s32 %s311, %s312
        %s314 = smul.addr %s313, 8
        %s315 = scalar_lea.vmem %s4, %s314
        %v316 = vld [vmem:[%s299] sm:$0xff]
        %v317 = vld [vmem:[%s307] sm:$0xff]
        %v318 = vld [vmem:[%s307 + $0x8] sm:$0xff]
        %v319 = vld [vmem:[%s307 + $0x10] sm:$0xff]
        %v320 = vld [vmem:[%s307 + $0x18] sm:$0xff]
        %v321 = vld [vmem:[%s2] sm:$0xff]
        %v322 = vld [vmem:[%s2 + $0x8] sm:$0xff]
        %v323 = vld [vmem:[%s2 + $0x10] sm:$0xff]
        %v324 = vld [vmem:[%s2 + $0x18] sm:$0xff]
        %v325 = vld [vmem:[%s3] sm:$0x1]
        %v327 = vlaneseq
        %v328 = vshrl.u32 %v327, 7
        %v329 = vsub.s32 0, %v328
        %v330 = vrot.slane %v325, %v329
        %vm332 = vcmask 261120
        %v334 = vsel %vm332, %v316, 0
        %336 = vmatprep.subr.mxu0 0.0
        %337 = vmatpush1.msra.mxu0 0.0
        %338 = vmatprep.subr.mxu0 0.0
        %339 = vmatpush1.msra.mxu0 0.0
        %340 = vmatprep.subr.mxu0 0.0
        %341 = vmatpush1.msra.mxu0 0.0
        %342 = vmatprep.subr.mxu0 0.0
        %343 = vmatpush1.msra.mxu0 0.0
        %344 = vmatprep.subr.mxu0 0.0
        %345 = vmatpush1.msra.mxu0 0.0
        %346 = vmatprep.subr.mxu0 0.0
        %347 = vmatpush1.msra.mxu0 0.0
        %348 = vmatprep.subr.mxu0 0.0
        %349 = vmatpush1.msra.mxu0 0.0
        %350 = vmatprep.subr.mxu0 0.0
        %351 = vmatpush1.msra.mxu0 0.0
        %352 = vmatprep.subr.mxu0 0.0
        %353 = vmatpush1.msra.mxu0 0.0
        %354 = vmatprep.subr.mxu0 0.0
        %355 = vmatpush1.msra.mxu0 0.0
        %356 = vmatprep.subr.mxu0 0.0
        %357 = vmatpush1.msra.mxu0 0.0
        %358 = vmatprep.subr.mxu0 0.0
        %359 = vmatpush1.msra.mxu0 0.0
        %360 = vmatprep.subr.mxu0 0.0
        %361 = vmatpush1.msra.mxu0 %v324
        %362 = vmatprep.subr.mxu0 0.0
        %363 = vmatpush1.msra.mxu0 %v323
        %364 = vmatprep.subr.mxu0 0.0
        %365 = vmatpush1.msra.mxu0 %v322
        %366 = vmatprep.subr.mxu0 0.0
        %367 = vmatpush1.msra.mxu0 %v321
        %368 = vmatprep.subr.mxu0 0.0
        %369 = vmatpush2.msra.mxu0 0.0
        %370 = vmatprep.subr.mxu0 0.0
        %371 = vmatpush2.msra.mxu0 0.0
        %372 = vmatprep.subr.mxu0 0.0
        %373 = vmatpush2.msra.mxu0 0.0
        %374 = vmatprep.subr.mxu0 0.0
        %375 = vmatpush2.msra.mxu0 0.0
        %376 = vmatprep.subr.mxu0 0.0
        %377 = vmatpush2.msra.mxu0 0.0
        %378 = vmatprep.subr.mxu0 0.0
        %379 = vmatpush2.msra.mxu0 0.0
        %380 = vmatprep.subr.mxu0 0.0
        %381 = vmatpush2.msra.mxu0 0.0
        %382 = vmatprep.subr.mxu0 0.0
        %383 = vmatpush2.msra.mxu0 0.0
        %384 = vmatprep.subr.mxu0 0.0
        %385 = vmatpush2.msra.mxu0 0.0
        %386 = vmatprep.subr.mxu0 0.0
        %387 = vmatpush2.msra.mxu0 0.0
        %388 = vmatprep.subr.mxu0 0.0
        %389 = vmatpush2.msra.mxu0 0.0
        %390 = vmatprep.subr.mxu0 0.0
        %391 = vmatpush2.msra.mxu0 0.0
        %392 = vmatprep.subr.mxu0 0.0
        %393 = vmatpush2.msra.mxu0 0.0
        %394 = vmatprep.subr.mxu0 0.0
        %395 = vmatpush2.msra.mxu0 0.0
        %396 = vmatprep.subr.mxu0 0.0
        %397 = vmatpush2.msra.mxu0 0.0
        %398 = vmatprep.subr.mxu0 0.0
        %399 = vmatpush2.msra.mxu0 0.0
        %400 = vmatprep.mubr.f32.mxu0 0.0
        %401 = vmatmul.mubr.f32.gmra.mxu0 %v334
        %v402 = vpop.f32.mrf.mxu0
        %v403 = vadd.f32 %v330, %v402
        %v404 = vpop.f32.mrf.mxu0
        %405 = vdwg.mxu0
        %v406 = vld [vmem:[%s315] sm:$0xff]
        %408 = vset.pattern.permute.xlu0 0
        %409 = vperm.xlu0 %408, %v406
        %v410 = vpop.permute.xlu0 %409
        %v413 = vsel %vm332, %v403, 0
        %415 = vmatprep.subr.mxu0 0.0
        %416 = vmatpush1.msra.mxu0 0.0
        %417 = vmatprep.subr.mxu0 0.0
        %418 = vmatpush1.msra.mxu0 0.0
        %419 = vmatprep.subr.mxu0 0.0
        %420 = vmatpush1.msra.mxu0 0.0
        %421 = vmatprep.subr.mxu0 0.0
        %422 = vmatpush1.msra.mxu0 0.0
        %423 = vmatprep.subr.mxu0 0.0
        %424 = vmatpush1.msra.mxu0 0.0
        %425 = vmatprep.subr.mxu0 0.0
        %426 = vmatpush1.msra.mxu0 0.0
        %427 = vmatprep.subr.mxu0 0.0
        %428 = vmatpush1.msra.mxu0 0.0
        %429 = vmatprep.subr.mxu0 0.0
        %430 = vmatpush1.msra.mxu0 0.0
        %431 = vmatprep.subr.mxu0 0.0
        %432 = vmatpush1.msra.mxu0 0.0
        %433 = vmatprep.subr.mxu0 0.0
        %434 = vmatpush1.msra.mxu0 0.0
        %435 = vmatprep.subr.mxu0 0.0
        %436 = vmatpush1.msra.mxu0 0.0
        %437 = vmatprep.subr.mxu0 0.0
        %438 = vmatpush1.msra.mxu0 0.0
        %439 = vmatprep.subr.mxu0 0.0
        %440 = vmatpush1.msra.mxu0 %v320
        %441 = vmatprep.subr.mxu0 0.0
        %442 = vmatpush1.msra.mxu0 %v319
        %443 = vmatprep.subr.mxu0 0.0
        %444 = vmatpush1.msra.mxu0 %v318
        %445 = vmatprep.subr.mxu0 0.0
        %446 = vmatpush1.msra.mxu0 %v317
        %447 = vmatprep.subr.mxu0 0.0
        %448 = vmatpush2.msra.mxu0 0.0
        %449 = vmatprep.subr.mxu0 0.0
        %450 = vmatpush2.msra.mxu0 0.0
        %451 = vmatprep.subr.mxu0 0.0
        %452 = vmatpush2.msra.mxu0 0.0
        %453 = vmatprep.subr.mxu0 0.0
        %454 = vmatpush2.msra.mxu0 0.0
        %455 = vmatprep.subr.mxu0 0.0
        %456 = vmatpush2.msra.mxu0 0.0
        %457 = vmatprep.subr.mxu0 0.0
        %458 = vmatpush2.msra.mxu0 0.0
        %459 = vmatprep.subr.mxu0 0.0
        %460 = vmatpush2.msra.mxu0 0.0
        %461 = vmatprep.subr.mxu0 0.0
        %462 = vmatpush2.msra.mxu0 0.0
        %463 = vmatprep.subr.mxu0 0.0
        %464 = vmatpush2.msra.mxu0 0.0
        %465 = vmatprep.subr.mxu0 0.0
        %466 = vmatpush2.msra.mxu0 0.0
        %467 = vmatprep.subr.mxu0 0.0
        %468 = vmatpush2.msra.mxu0 0.0
        %469 = vmatprep.subr.mxu0 0.0
        %470 = vmatpush2.msra.mxu0 0.0
        %471 = vmatprep.subr.mxu0 0.0
        %472 = vmatpush2.msra.mxu0 0.0
        %473 = vmatprep.subr.mxu0 0.0
        %474 = vmatpush2.msra.mxu0 0.0
        %475 = vmatprep.subr.mxu0 0.0
        %476 = vmatpush2.msra.mxu0 0.0
        %477 = vmatprep.subr.mxu0 0.0
        %478 = vmatpush2.msra.mxu0 0.0
        %479 = vmatprep.mubr.f32.mxu0 0.0
        %480 = vmatmul.mubr.f32.gmra.mxu0 %v413
        %v481 = vpop.f32.mrf.mxu0
        %v482 = vadd.f32 %v410, %v481
        %v483 = vpop.f32.mrf.mxu0
        %484 = vdwg.mxu0
        %vm485 = vcmask 64512
        %486 = vst.msk [vmem:[%s292] sm:$0xff] %vm485, %v482
        %s487 = scalar_lea.vmem %s2, 32
        %v488 = vld [vmem:[%s487] sm:$0xff]
        %v489 = vld [vmem:[%s487 + $0x8] sm:$0xff]
        %v490 = vld [vmem:[%s487 + $0x10] sm:$0xff]
        %v491 = vld [vmem:[%s487 + $0x18] sm:$0xff]
        %s492 = scalar_lea.vmem %s3, 1
        %v493 = vld [vmem:[%s492] sm:$0x1]
        %v495 = vlaneseq
        %v496 = vshrl.u32 %v495, 7
        %v497 = vsub.s32 0, %v496
        %v498 = vrot.slane %v493, %v497
        %500 = vmatprep.subr.mxu0 0.0
        %501 = vmatpush1.msra.mxu0 0.0
        %502 = vmatprep.subr.mxu0 0.0
        %503 = vmatpush1.msra.mxu0 0.0
        %504 = vmatprep.subr.mxu0 0.0
        %505 = vmatpush1.msra.mxu0 0.0
        %506 = vmatprep.subr.mxu0 0.0
        %507 = vmatpush1.msra.mxu0 0.0
        %508 = vmatprep.subr.mxu0 0.0
        %509 = vmatpush1.msra.mxu0 0.0
        %510 = vmatprep.subr.mxu0 0.0
        %511 = vmatpush1.msra.mxu0 0.0
        %512 = vmatprep.subr.mxu0 0.0
        %513 = vmatpush1.msra.mxu0 0.0
        %514 = vmatprep.subr.mxu0 0.0
        %515 = vmatpush1.msra.mxu0 0.0
        %516 = vmatprep.subr.mxu0 0.0
        %517 = vmatpush1.msra.mxu0 0.0
        %518 = vmatprep.subr.mxu0 0.0
        %519 = vmatpush1.msra.mxu0 0.0
        %520 = vmatprep.subr.mxu0 0.0
        %521 = vmatpush1.msra.mxu0 0.0
        %522 = vmatprep.subr.mxu0 0.0
        %523 = vmatpush1.msra.mxu0 0.0
        %524 = vmatprep.subr.mxu0 0.0
        %525 = vmatpush1.msra.mxu0 %v491
        %526 = vmatprep.subr.mxu0 0.0
        %527 = vmatpush1.msra.mxu0 %v490
        %528 = vmatprep.subr.mxu0 0.0
        %529 = vmatpush1.msra.mxu0 %v489
        %530 = vmatprep.subr.mxu0 0.0
        %531 = vmatpush1.msra.mxu0 %v488
        %532 = vmatprep.subr.mxu0 0.0
        %533 = vmatpush2.msra.mxu0 0.0
        %534 = vmatprep.subr.mxu0 0.0
        %535 = vmatpush2.msra.mxu0 0.0
        %536 = vmatprep.subr.mxu0 0.0
        %537 = vmatpush2.msra.mxu0 0.0
        %538 = vmatprep.subr.mxu0 0.0
        %539 = vmatpush2.msra.mxu0 0.0
        %540 = vmatprep.subr.mxu0 0.0
        %541 = vmatpush2.msra.mxu0 0.0
        %542 = vmatprep.subr.mxu0 0.0
        %543 = vmatpush2.msra.mxu0 0.0
        %544 = vmatprep.subr.mxu0 0.0
        %545 = vmatpush2.msra.mxu0 0.0
        %546 = vmatprep.subr.mxu0 0.0
        %547 = vmatpush2.msra.mxu0 0.0
        %548 = vmatprep.subr.mxu0 0.0
        %549 = vmatpush2.msra.mxu0 0.0
        %550 = vmatprep.subr.mxu0 0.0
        %551 = vmatpush2.msra.mxu0 0.0
        %552 = vmatprep.subr.mxu0 0.0
        %553 = vmatpush2.msra.mxu0 0.0
        %554 = vmatprep.subr.mxu0 0.0
        %555 = vmatpush2.msra.mxu0 0.0
        %556 = vmatprep.subr.mxu0 0.0
        %557 = vmatpush2.msra.mxu0 0.0
        %558 = vmatprep.subr.mxu0 0.0
        %559 = vmatpush2.msra.mxu0 0.0
        %560 = vmatprep.subr.mxu0 0.0
        %561 = vmatpush2.msra.mxu0 0.0
        %562 = vmatprep.subr.mxu0 0.0
        %563 = vmatpush2.msra.mxu0 0.0
        %564 = vmatprep.mubr.f32.mxu0 0.0
        %565 = vmatmul.mubr.f32.gmra.mxu0 %v334
        %v566 = vpop.f32.mrf.mxu0
        %v567 = vadd.f32 %v498, %v566
        %v568 = vpop.f32.mrf.mxu0
        %569 = vdwg.mxu0
        %s570 = scalar_lea.vmem %s315, 8
        %v571 = vld [vmem:[%s570] sm:$0xff]
        %573 = vset.pattern.permute.xlu0 0
        %574 = vperm.xlu0 %573, %v571
        %v575 = vpop.permute.xlu0 %574
        %v578 = vsel %vm332, %v567, 0
        %580 = vmatprep.subr.mxu0 0.0
        %581 = vmatpush1.msra.mxu0 0.0
        %582 = vmatprep.subr.mxu0 0.0
        %583 = vmatpush1.msra.mxu0 0.0
        %584 = vmatprep.subr.mxu0 0.0
        %585 = vmatpush1.msra.mxu0 0.0
        %586 = vmatprep.subr.mxu0 0.0
        %587 = vmatpush1.msra.mxu0 0.0
        %588 = vmatprep.subr.mxu0 0.0
        %589 = vmatpush1.msra.mxu0 0.0
        %590 = vmatprep.subr.mxu0 0.0
        %591 = vmatpush1.msra.mxu0 0.0
        %592 = vmatprep.subr.mxu0 0.0
        %593 = vmatpush1.msra.mxu0 0.0
        %594 = vmatprep.subr.mxu0 0.0
        %595 = vmatpush1.msra.mxu0 0.0
        %596 = vmatprep.subr.mxu0 0.0
        %597 = vmatpush1.msra.mxu0 0.0
        %598 = vmatprep.subr.mxu0 0.0
        %599 = vmatpush1.msra.mxu0 0.0
        %600 = vmatprep.subr.mxu0 0.0
        %601 = vmatpush1.msra.mxu0 0.0
        %602 = vmatprep.subr.mxu0 0.0
        %603 = vmatpush1.msra.mxu0 0.0
        %604 = vmatprep.subr.mxu0 0.0
        %605 = vmatpush1.msra.mxu0 %v320
        %606 = vmatprep.subr.mxu0 0.0
        %607 = vmatpush1.msra.mxu0 %v319
        %608 = vmatprep.subr.mxu0 0.0
        %609 = vmatpush1.msra.mxu0 %v318
        %610 = vmatprep.subr.mxu0 0.0
        %611 = vmatpush1.msra.mxu0 %v317
        %612 = vmatprep.subr.mxu0 0.0
        %613 = vmatpush2.msra.mxu0 0.0
        %614 = vmatprep.subr.mxu0 0.0
        %615 = vmatpush2.msra.mxu0 0.0
        %616 = vmatprep.subr.mxu0 0.0
        %617 = vmatpush2.msra.mxu0 0.0
        %618 = vmatprep.subr.mxu0 0.0
        %619 = vmatpush2.msra.mxu0 0.0
        %620 = vmatprep.subr.mxu0 0.0
        %621 = vmatpush2.msra.mxu0 0.0
        %622 = vmatprep.subr.mxu0 0.0
        %623 = vmatpush2.msra.mxu0 0.0
        %624 = vmatprep.subr.mxu0 0.0
        %625 = vmatpush2.msra.mxu0 0.0
        %626 = vmatprep.subr.mxu0 0.0
        %627 = vmatpush2.msra.mxu0 0.0
        %628 = vmatprep.subr.mxu0 0.0
        %629 = vmatpush2.msra.mxu0 0.0
        %630 = vmatprep.subr.mxu0 0.0
        %631 = vmatpush2.msra.mxu0 0.0
        %632 = vmatprep.subr.mxu0 0.0
        %633 = vmatpush2.msra.mxu0 0.0
        %634 = vmatprep.subr.mxu0 0.0
        %635 = vmatpush2.msra.mxu0 0.0
        %636 = vmatprep.subr.mxu0 0.0
        %637 = vmatpush2.msra.mxu0 0.0
        %638 = vmatprep.subr.mxu0 0.0
        %639 = vmatpush2.msra.mxu0 0.0
        %640 = vmatprep.subr.mxu0 0.0
        %641 = vmatpush2.msra.mxu0 0.0
        %642 = vmatprep.subr.mxu0 0.0
        %643 = vmatpush2.msra.mxu0 0.0
        %644 = vmatprep.mubr.f32.mxu0 0.0
        %645 = vmatmul.mubr.f32.gmra.mxu0 %v578
        %v646 = vpop.f32.mrf.mxu0
        %v647 = vadd.f32 %v575, %v646
        %v648 = vpop.f32.mrf.mxu0
        %649 = vdwg.mxu0
        %s650 = scalar_lea.vmem %s292, 8 [#allocation2]
        %651 = vst.msk [vmem:[%s650] sm:$0xff] %vm485, %v647
        %s652 = scalar_lea.vmem %s2, 64
        %v653 = vld [vmem:[%s652] sm:$0xff]
        %v654 = vld [vmem:[%s652 + $0x8] sm:$0xff]
        %v655 = vld [vmem:[%s652 + $0x10] sm:$0xff]
        %v656 = vld [vmem:[%s652 + $0x18] sm:$0xff]
        %s657 = scalar_lea.vmem %s3, 2
        %v658 = vld [vmem:[%s657] sm:$0x1]
        %v660 = vlaneseq
        %v661 = vshrl.u32 %v660, 7
        %v662 = vsub.s32 0, %v661
        %v663 = vrot.slane %v658, %v662
        %665 = vmatprep.subr.mxu0 0.0
        %666 = vmatpush1.msra.mxu0 0.0
        %667 = vmatprep.subr.mxu0 0.0
        %668 = vmatpush1.msra.mxu0 0.0
        %669 = vmatprep.subr.mxu0 0.0
        %670 = vmatpush1.msra.mxu0 0.0
        %671 = vmatprep.subr.mxu0 0.0
        %672 = vmatpush1.msra.mxu0 0.0
        %673 = vmatprep.subr.mxu0 0.0
        %674 = vmatpush1.msra.mxu0 0.0
        %675 = vmatprep.subr.mxu0 0.0
        %676 = vmatpush1.msra.mxu0 0.0
        %677 = vmatprep.subr.mxu0 0.0
        %678 = vmatpush1.msra.mxu0 0.0
        %679 = vmatprep.subr.mxu0 0.0
        %680 = vmatpush1.msra.mxu0 0.0
        %681 = vmatprep.subr.mxu0 0.0
        %682 = vmatpush1.msra.mxu0 0.0
        %683 = vmatprep.subr.mxu0 0.0
        %684 = vmatpush1.msra.mxu0 0.0
        %685 = vmatprep.subr.mxu0 0.0
        %686 = vmatpush1.msra.mxu0 0.0
        %687 = vmatprep.subr.mxu0 0.0
        %688 = vmatpush1.msra.mxu0 0.0
        %689 = vmatprep.subr.mxu0 0.0
        %690 = vmatpush1.msra.mxu0 %v656
        %691 = vmatprep.subr.mxu0 0.0
        %692 = vmatpush1.msra.mxu0 %v655
        %693 = vmatprep.subr.mxu0 0.0
        %694 = vmatpush1.msra.mxu0 %v654
        %695 = vmatprep.subr.mxu0 0.0
        %696 = vmatpush1.msra.mxu0 %v653
        %697 = vmatprep.subr.mxu0 0.0
        %698 = vmatpush2.msra.mxu0 0.0
        %699 = vmatprep.subr.mxu0 0.0
        %700 = vmatpush2.msra.mxu0 0.0
        %701 = vmatprep.subr.mxu0 0.0
        %702 = vmatpush2.msra.mxu0 0.0
        %703 = vmatprep.subr.mxu0 0.0
        %704 = vmatpush2.msra.mxu0 0.0
        %705 = vmatprep.subr.mxu0 0.0
        %706 = vmatpush2.msra.mxu0 0.0
        %707 = vmatprep.subr.mxu0 0.0
        %708 = vmatpush2.msra.mxu0 0.0
        %709 = vmatprep.subr.mxu0 0.0
        %710 = vmatpush2.msra.mxu0 0.0
        %711 = vmatprep.subr.mxu0 0.0
        %712 = vmatpush2.msra.mxu0 0.0
        %713 = vmatprep.subr.mxu0 0.0
        %714 = vmatpush2.msra.mxu0 0.0
        %715 = vmatprep.subr.mxu0 0.0
        %716 = vmatpush2.msra.mxu0 0.0
        %717 = vmatprep.subr.mxu0 0.0
        %718 = vmatpush2.msra.mxu0 0.0
        %719 = vmatprep.subr.mxu0 0.0
        %720 = vmatpush2.msra.mxu0 0.0
        %721 = vmatprep.subr.mxu0 0.0
        %722 = vmatpush2.msra.mxu0 0.0
        %723 = vmatprep.subr.mxu0 0.0
        %724 = vmatpush2.msra.mxu0 0.0
        %725 = vmatprep.subr.mxu0 0.0
        %726 = vmatpush2.msra.mxu0 0.0
        %727 = vmatprep.subr.mxu0 0.0
        %728 = vmatpush2.msra.mxu0 0.0
        %729 = vmatprep.mubr.f32.mxu0 0.0
        %730 = vmatmul.mubr.f32.gmra.mxu0 %v334
        %v731 = vpop.f32.mrf.mxu0
        %v732 = vadd.f32 %v663, %v731
        %v733 = vpop.f32.mrf.mxu0
        %734 = vdwg.mxu0
        %s735 = scalar_lea.vmem %s315, 16
        %v736 = vld [vmem:[%s735] sm:$0xff]
        %738 = vset.pattern.permute.xlu0 0
        %739 = vperm.xlu0 %738, %v736
        %v740 = vpop.permute.xlu0 %739
        %v743 = vsel %vm332, %v732, 0
        %745 = vmatprep.subr.mxu0 0.0
        %746 = vmatpush1.msra.mxu0 0.0
        %747 = vmatprep.subr.mxu0 0.0
        %748 = vmatpush1.msra.mxu0 0.0
        %749 = vmatprep.subr.mxu0 0.0
        %750 = vmatpush1.msra.mxu0 0.0
        %751 = vmatprep.subr.mxu0 0.0
        %752 = vmatpush1.msra.mxu0 0.0
        %753 = vmatprep.subr.mxu0 0.0
        %754 = vmatpush1.msra.mxu0 0.0
        %755 = vmatprep.subr.mxu0 0.0
        %756 = vmatpush1.msra.mxu0 0.0
        %757 = vmatprep.subr.mxu0 0.0
        %758 = vmatpush1.msra.mxu0 0.0
        %759 = vmatprep.subr.mxu0 0.0
        %760 = vmatpush1.msra.mxu0 0.0
        %761 = vmatprep.subr.mxu0 0.0
        %762 = vmatpush1.msra.mxu0 0.0
        %763 = vmatprep.subr.mxu0 0.0
        %764 = vmatpush1.msra.mxu0 0.0
        %765 = vmatprep.subr.mxu0 0.0
        %766 = vmatpush1.msra.mxu0 0.0
        %767 = vmatprep.subr.mxu0 0.0
        %768 = vmatpush1.msra.mxu0 0.0
        %769 = vmatprep.subr.mxu0 0.0
        %770 = vmatpush1.msra.mxu0 %v320
        %771 = vmatprep.subr.mxu0 0.0
        %772 = vmatpush1.msra.mxu0 %v319
        %773 = vmatprep.subr.mxu0 0.0
        %774 = vmatpush1.msra.mxu0 %v318
        %775 = vmatprep.subr.mxu0 0.0
        %776 = vmatpush1.msra.mxu0 %v317
        %777 = vmatprep.subr.mxu0 0.0
        %778 = vmatpush2.msra.mxu0 0.0
        %779 = vmatprep.subr.mxu0 0.0
        %780 = vmatpush2.msra.mxu0 0.0
        %781 = vmatprep.subr.mxu0 0.0
        %782 = vmatpush2.msra.mxu0 0.0
        %783 = vmatprep.subr.mxu0 0.0
        %784 = vmatpush2.msra.mxu0 0.0
        %785 = vmatprep.subr.mxu0 0.0
        %786 = vmatpush2.msra.mxu0 0.0
        %787 = vmatprep.subr.mxu0 0.0
        %788 = vmatpush2.msra.mxu0 0.0
        %789 = vmatprep.subr.mxu0 0.0
        %790 = vmatpush2.msra.mxu0 0.0
        %791 = vmatprep.subr.mxu0 0.0
        %792 = vmatpush2.msra.mxu0 0.0
        %793 = vmatprep.subr.mxu0 0.0
        %794 = vmatpush2.msra.mxu0 0.0
        %795 = vmatprep.subr.mxu0 0.0
        %796 = vmatpush2.msra.mxu0 0.0
        %797 = vmatprep.subr.mxu0 0.0
        %798 = vmatpush2.msra.mxu0 0.0
        %799 = vmatprep.subr.mxu0 0.0
        %800 = vmatpush2.msra.mxu0 0.0
        %801 = vmatprep.subr.mxu0 0.0
        %802 = vmatpush2.msra.mxu0 0.0
        %803 = vmatprep.subr.mxu0 0.0
        %804 = vmatpush2.msra.mxu0 0.0
        %805 = vmatprep.subr.mxu0 0.0
        %806 = vmatpush2.msra.mxu0 0.0
        %807 = vmatprep.subr.mxu0 0.0
        %808 = vmatpush2.msra.mxu0 0.0
        %809 = vmatprep.mubr.f32.mxu0 0.0
        %810 = vmatmul.mubr.f32.gmra.mxu0 %v743
        %v811 = vpop.f32.mrf.mxu0
        %v812 = vadd.f32 %v740, %v811
        %v813 = vpop.f32.mrf.mxu0
        %814 = vdwg.mxu0
        %s815 = scalar_lea.vmem %s292, 16 [#allocation2]
        %816 = vst.msk [vmem:[%s815] sm:$0xff] %vm485, %v812
        %s817 = scalar_lea.vmem %s2, 96
        %v818 = vld [vmem:[%s817] sm:$0xff]
        %v819 = vld [vmem:[%s817 + $0x8] sm:$0xff]
        %v820 = vld [vmem:[%s817 + $0x10] sm:$0xff]
        %v821 = vld [vmem:[%s817 + $0x18] sm:$0xff]
        %s822 = scalar_lea.vmem %s3, 3
        %v823 = vld [vmem:[%s822] sm:$0x1]
        %v825 = vlaneseq
        %v826 = vshrl.u32 %v825, 7
        %v827 = vsub.s32 0, %v826
        %v828 = vrot.slane %v823, %v827
        %830 = vmatprep.subr.mxu0 0.0
        %831 = vmatpush1.msra.mxu0 0.0
        %832 = vmatprep.subr.mxu0 0.0
        %833 = vmatpush1.msra.mxu0 0.0
        %834 = vmatprep.subr.mxu0 0.0
        %835 = vmatpush1.msra.mxu0 0.0
        %836 = vmatprep.subr.mxu0 0.0
        %837 = vmatpush1.msra.mxu0 0.0
        %838 = vmatprep.subr.mxu0 0.0
        %839 = vmatpush1.msra.mxu0 0.0
        %840 = vmatprep.subr.mxu0 0.0
        %841 = vmatpush1.msra.mxu0 0.0
        %842 = vmatprep.subr.mxu0 0.0
        %843 = vmatpush1.msra.mxu0 0.0
        %844 = vmatprep.subr.mxu0 0.0
        %845 = vmatpush1.msra.mxu0 0.0
        %846 = vmatprep.subr.mxu0 0.0
        %847 = vmatpush1.msra.mxu0 0.0
        %848 = vmatprep.subr.mxu0 0.0
        %849 = vmatpush1.msra.mxu0 0.0
        %850 = vmatprep.subr.mxu0 0.0
        %851 = vmatpush1.msra.mxu0 0.0
        %852 = vmatprep.subr.mxu0 0.0
        %853 = vmatpush1.msra.mxu0 0.0
        %854 = vmatprep.subr.mxu0 0.0
        %855 = vmatpush1.msra.mxu0 %v821
        %856 = vmatprep.subr.mxu0 0.0
        %857 = vmatpush1.msra.mxu0 %v820
        %858 = vmatprep.subr.mxu0 0.0
        %859 = vmatpush1.msra.mxu0 %v819
        %860 = vmatprep.subr.mxu0 0.0
        %861 = vmatpush1.msra.mxu0 %v818
        %862 = vmatprep.subr.mxu0 0.0
        %863 = vmatpush2.msra.mxu0 0.0
        %864 = vmatprep.subr.mxu0 0.0
        %865 = vmatpush2.msra.mxu0 0.0
        %866 = vmatprep.subr.mxu0 0.0
        %867 = vmatpush2.msra.mxu0 0.0
        %868 = vmatprep.subr.mxu0 0.0
        %869 = vmatpush2.msra.mxu0 0.0
        %870 = vmatprep.subr.mxu0 0.0
        %871 = vmatpush2.msra.mxu0 0.0
        %872 = vmatprep.subr.mxu0 0.0
        %873 = vmatpush2.msra.mxu0 0.0
        %874 = vmatprep.subr.mxu0 0.0
        %875 = vmatpush2.msra.mxu0 0.0
        %876 = vmatprep.subr.mxu0 0.0
        %877 = vmatpush2.msra.mxu0 0.0
        %878 = vmatprep.subr.mxu0 0.0
        %879 = vmatpush2.msra.mxu0 0.0
        %880 = vmatprep.subr.mxu0 0.0
        %881 = vmatpush2.msra.mxu0 0.0
        %882 = vmatprep.subr.mxu0 0.0
        %883 = vmatpush2.msra.mxu0 0.0
        %884 = vmatprep.subr.mxu0 0.0
        %885 = vmatpush2.msra.mxu0 0.0
        %886 = vmatprep.subr.mxu0 0.0
        %887 = vmatpush2.msra.mxu0 0.0
        %888 = vmatprep.subr.mxu0 0.0
        %889 = vmatpush2.msra.mxu0 0.0
        %890 = vmatprep.subr.mxu0 0.0
        %891 = vmatpush2.msra.mxu0 0.0
        %892 = vmatprep.subr.mxu0 0.0
        %893 = vmatpush2.msra.mxu0 0.0
        %894 = vmatprep.mubr.f32.mxu0 0.0
        %895 = vmatmul.mubr.f32.gmra.mxu0 %v334
        %v896 = vpop.f32.mrf.mxu0
        %v897 = vadd.f32 %v828, %v896
        %v898 = vpop.f32.mrf.mxu0
        %899 = vdwg.mxu0
        %s900 = scalar_lea.vmem %s315, 24
        %v901 = vld [vmem:[%s900] sm:$0xff]
        %903 = vset.pattern.permute.xlu0 0
        %904 = vperm.xlu0 %903, %v901
        %v905 = vpop.permute.xlu0 %904
        %v908 = vsel %vm332, %v897, 0
        %910 = vmatprep.subr.mxu0 0.0
        %911 = vmatpush1.msra.mxu0 0.0
        %912 = vmatprep.subr.mxu0 0.0
        %913 = vmatpush1.msra.mxu0 0.0
        %914 = vmatprep.subr.mxu0 0.0
        %915 = vmatpush1.msra.mxu0 0.0
        %916 = vmatprep.subr.mxu0 0.0
        %917 = vmatpush1.msra.mxu0 0.0
        %918 = vmatprep.subr.mxu0 0.0
        %919 = vmatpush1.msra.mxu0 0.0
        %920 = vmatprep.subr.mxu0 0.0
        %921 = vmatpush1.msra.mxu0 0.0
        %922 = vmatprep.subr.mxu0 0.0
        %923 = vmatpush1.msra.mxu0 0.0
        %924 = vmatprep.subr.mxu0 0.0
        %925 = vmatpush1.msra.mxu0 0.0
        %926 = vmatprep.subr.mxu0 0.0
        %927 = vmatpush1.msra.mxu0 0.0
        %928 = vmatprep.subr.mxu0 0.0
        %929 = vmatpush1.msra.mxu0 0.0
        %930 = vmatprep.subr.mxu0 0.0
        %931 = vmatpush1.msra.mxu0 0.0
        %932 = vmatprep.subr.mxu0 0.0
        %933 = vmatpush1.msra.mxu0 0.0
        %934 = vmatprep.subr.mxu0 0.0
        %935 = vmatpush1.msra.mxu0 %v320
        %936 = vmatprep.subr.mxu0 0.0
        %937 = vmatpush1.msra.mxu0 %v319
        %938 = vmatprep.subr.mxu0 0.0
        %939 = vmatpush1.msra.mxu0 %v318
        %940 = vmatprep.subr.mxu0 0.0
        %941 = vmatpush1.msra.mxu0 %v317
        %942 = vmatprep.subr.mxu0 0.0
        %943 = vmatpush2.msra.mxu0 0.0
        %944 = vmatprep.subr.mxu0 0.0
        %945 = vmatpush2.msra.mxu0 0.0
        %946 = vmatprep.subr.mxu0 0.0
        %947 = vmatpush2.msra.mxu0 0.0
        %948 = vmatprep.subr.mxu0 0.0
        %949 = vmatpush2.msra.mxu0 0.0
        %950 = vmatprep.subr.mxu0 0.0
        %951 = vmatpush2.msra.mxu0 0.0
        %952 = vmatprep.subr.mxu0 0.0
        %953 = vmatpush2.msra.mxu0 0.0
        %954 = vmatprep.subr.mxu0 0.0
        %955 = vmatpush2.msra.mxu0 0.0
        %956 = vmatprep.subr.mxu0 0.0
        %957 = vmatpush2.msra.mxu0 0.0
        %958 = vmatprep.subr.mxu0 0.0
        %959 = vmatpush2.msra.mxu0 0.0
        %960 = vmatprep.subr.mxu0 0.0
        %961 = vmatpush2.msra.mxu0 0.0
        %962 = vmatprep.subr.mxu0 0.0
        %963 = vmatpush2.msra.mxu0 0.0
        %964 = vmatprep.subr.mxu0 0.0
        %965 = vmatpush2.msra.mxu0 0.0
        %966 = vmatprep.subr.mxu0 0.0
        %967 = vmatpush2.msra.mxu0 0.0
        %968 = vmatprep.subr.mxu0 0.0
        %969 = vmatpush2.msra.mxu0 0.0
        %970 = vmatprep.subr.mxu0 0.0
        %971 = vmatpush2.msra.mxu0 0.0
        %972 = vmatprep.subr.mxu0 0.0
        %973 = vmatpush2.msra.mxu0 0.0
        %974 = vmatprep.mubr.f32.mxu0 0.0
        %975 = vmatmul.mubr.f32.gmra.mxu0 %v908
        %v976 = vpop.f32.mrf.mxu0
        %v977 = vadd.f32 %v905, %v976
        %v978 = vpop.f32.mrf.mxu0
        %979 = vdwg.mxu0
        %s980 = scalar_lea.vmem %s292, 24 [#allocation2]
        %981 = vst.msk [vmem:[%s980] sm:$0xff] %vm485, %v977
        %s982 = sand.u32 %s176, 1
        %s983 = scalar_lea.sflag [#allocation3], %s982
        %s984 = sand.u32 %s176, 1
        %s985 = smul.addr %s984, 32
        %s986 = scalar_lea.vmem [#allocation2], %s985
        // Predicated region
        $region41: #{tpu_custom_call.1} parent=39 // pred_check
          %p987 = pneg %p186
        $region42: #{tpu_custom_call.1} parent=39 // pred_check_branch
          %989 = sbr.rel (%p987) target = $region44
        $region43: #{tpu_custom_call.1} parent=39 // pred_region
          %s991 = ssub.s32 512, 512
          %992 = vsyncadd %s983, %s991
          %s993 = sadd.s32 %s26, %s25
          %s994 = smul.addr %s24, 4
          %s995 = sadd.s32 %s993, %s994
          %s996 = smul.addr %s995, 128
          %s997 = scalar_lea.hbm %s5, %s996
          %s998 = sshll.u32 %s986, 4
          %s999 = int_to_ptr.vmem [resolvable:$true] %s998
          %1004 = dma.vmem_to_hbm [thread:$0]  %s999, 512, %s997, %s983, 128, 128, 8
        $region44: #{tpu_custom_call.1} parent=39 // pred_fallthru
          _
      $region40: #{tpu_custom_call.1} parent=5 // pred_fallthru
        _
      %p1005 = scmp.le.s32.totalorder 2, %s14
      // Predicated region
      $region45: #{tpu_custom_call.1} parent=5 // pred_check
        %p1006 = pneg %p1005
      $region46: #{tpu_custom_call.1} parent=5 // pred_check_branch
        %1008 = sbr.rel (%p1006) target = $region48
      $region47: #{tpu_custom_call.1} parent=5 // pred_region
        %s1009 = ssub.s32 %s14, 2
        // Predicated region
        $region49: #{tpu_custom_call.1} parent=47 // pred_check
          %p1010 = pneg %p192
        $region50: #{tpu_custom_call.1} parent=47 // pred_check_branch
          %1012 = sbr.rel (%p1010) target = $region52
        $region51: #{tpu_custom_call.1} parent=47 // pred_region
          %s1013 = sand.u32 %s177, 1
          %s1014 = scalar_lea.sflag [#allocation3], %s1013
          %s1015 = sand.u32 %s177, 1
          %s1016 = smul.addr %s1015, 32
          %s1017 = scalar_lea.vmem [#allocation2], %s1016
          %1018 = dma.done %s1014, 512
        $region52: #{tpu_custom_call.1} parent=47 // pred_fallthru
          _
      $region48: #{tpu_custom_call.1} parent=5 // pred_fallthru
        _
    $region6: #{tpu_custom_call.1} parent=1 // loop_footer
      %s18 = sadd.s32 1, %s14
    $region7: #{tpu_custom_call.1} parent=1 // loop_footer_branch
      %13 = sbr.rel target = $region3
    $region8: #{tpu_custom_call.1} parent=1 // loop_exit
      _
    %1019 = vsyncpa [#allocation3], 1
    %s1020 = scalar_lea.sflag [#allocation3], 1
    %1021 = vsyncpa %s1020, 1

</llo_original>
